<compile_context>
chip_gen: v5e
topology: v5e:2x2
jax: 0.10.0
libtpu: 0.0.40
codegen_flags: <defaults>
</compile_context>

<pallas_src>
import jax
import jax.numpy as jnp
from jax import lax
from jax.experimental import pallas as pl
from jax.experimental.pallas import tpu as pltpu


_CHUNK = 8  # sublane-groups per compute chunk: one f32 vreg per value


def _cmul(ar, ai, br, bi):
    # (ar + i*ai) * (br + i*bi)
    return ar * br - ai * bi, ar * bi + ai * br


def _cmul_conj(ar, ai, br, bi):
    # (ar + i*ai) * conj(br + i*bi)
    return ar * br + ai * bi, ai * br - ar * bi


def _cadd(a, b):
    return a[0] + b[0], a[1] + b[1]


def qlayer_kernel(w_ref, theta_ref, x_ref, rho_ref, out_ref):
    # w_ref:     (3, D)          f32  SMEM
    # theta_ref: (3,)            f32  SMEM
    # x_ref:     (D, nbt, 128)   f32  VMEM   batch = (sublane-group, lane)
    # rho_ref:   (8, nbt, 128)   f32  VMEM   rows = [re00,im00,re01,im01,re10,im10,re11,im11]
    # out_ref:   (8, nbt, 128)   f32  VMEM   same row layout
    D = x_ref.shape[0]
    nbt = rho_ref.shape[1]

    def chunk(kc, carry):
        r = pl.multiple_of(kc * _CHUNK, _CHUNK)
        sl = pl.ds(r, _CHUNK)

        # phi_i = theta_i + sum_j w[i, j] * x[j]  -- dense (8, 128) planes,
        # scalar (SMEM) weights broadcast over the batch.
        xs = [x_ref[j, sl, :] for j in range(D)]
        phi = []
        for i in range(3):
            acc = xs[0] * w_ref[i, 0] + theta_ref[i]
            for j in range(1, D):
                acc = acc + xs[j] * w_ref[i, j]
            phi.append(acc)
        # TODO(synk): for large D, compute phi with an MXU jnp.dot (w padded to
        # (8, D) in VMEM) instead of this serial FMA chain.
        phi0, phi1, phi2 = phi

        c = jnp.cos(phi0 * 0.5)
        s = jnp.sin(phi0 * 0.5)
        pa = (phi1 + phi2) * 0.5
        pb = (phi1 - phi2) * 0.5
        cosa, sina = jnp.cos(pa), jnp.sin(pa)
        cosb, sinb = jnp.cos(pb), jnp.sin(pb)

        # U entries as (re, im) dense planes.
        U00r, U00i = c * cosa, c * sina
        U01r, U01i = -s * cosb, -s * sinb
        U10r, U10i = s * cosb, -s * sinb
        U11r, U11i = U00r, -U00i

        r00 = (rho_ref[0, sl, :], rho_ref[1, sl, :])
        r01 = (rho_ref[2, sl, :], rho_ref[3, sl, :])
        r10 = (rho_ref[4, sl, :], rho_ref[5, sl, :])
        r11 = (rho_ref[6, sl, :], rho_ref[7, sl, :])

        # M = U @ rho  (per-batch 2x2 complex matmul written out explicitly)
        M00 = _cadd(_cmul(U00r, U00i, *r00), _cmul(U01r, U01i, *r10))
        M01 = _cadd(_cmul(U00r, U00i, *r01), _cmul(U01r, U01i, *r11))
        M10 = _cadd(_cmul(U10r, U10i, *r00), _cmul(U11r, U11i, *r10))
        M11 = _cadd(_cmul(U10r, U10i, *r01), _cmul(U11r, U11i, *r11))

        # rho'_{ij} = sum_n M_{in} * conj(U_{jn}).  Full general computation
        # (no Hermitian shortcut) so semantics match the PyTorch module for
        # arbitrary (not-necessarily-Hermitian) rho.
        O00 = _cadd(_cmul_conj(*M00, U00r, U00i), _cmul_conj(*M01, U01r, U01i))
        O01 = _cadd(_cmul_conj(*M00, U10r, U10i), _cmul_conj(*M01, U11r, U11i))
        O10 = _cadd(_cmul_conj(*M10, U00r, U00i), _cmul_conj(*M11, U01r, U01i))
        O11 = _cadd(_cmul_conj(*M10, U10r, U10i), _cmul_conj(*M11, U11r, U11i))

        # Direct unmasked per-component stores (no sublane concatenate).
        out_ref[0, sl, :] = O00[0]
        out_ref[1, sl, :] = O00[1]
        out_ref[2, sl, :] = O01[0]
        out_ref[3, sl, :] = O01[1]
        out_ref[4, sl, :] = O10[0]
        out_ref[5, sl, :] = O10[1]
        out_ref[6, sl, :] = O11[0]
        out_ref[7, sl, :] = O11[1]
        return carry

    lax.fori_loop(0, nbt // _CHUNK, chunk, 0)


def _plan_tiling(B):
    """Choose (nbt, nB_pad): sublane-groups per block and padded group count."""
    nB = pl.cdiv(B, 128)                  # number of 128-lane batch groups
    nB8 = pl.cdiv(nB, 8) * 8              # every block a multiple of 8 groups
    n_blocks = pl.cdiv(nB8, 64)           # cap blocks at 64 groups (8192 rows, ~1 MB VMEM/step)
    if n_blocks == 1 and nB8 >= 16:
        n_blocks = 2                      # grid >= 2 so v7x can use both TensorCores
    nbt = pl.cdiv(pl.cdiv(nB8, n_blocks), 8) * 8
    nB_pad = nbt * n_blocks
    return nbt, nB_pad


def qlayer_forward_planar(rho_p, x_p, w, theta, nbt):
    """Planar-layout forward: rho_p (8, nB, 128) f32, x_p (D, nB, 128) f32.

    Chained layers should call this directly (keeping rho in the planar f32
    layout) to avoid the per-layer HBM relayout passes in qlayer_forward.
    """
    _, nB, _ = rho_p.shape
    D = x_p.shape[0]
    grid = (nB // nbt,)
    return pl.pallas_call(
        qlayer_kernel,
        out_shape=jax.ShapeDtypeStruct((8, nB, 128), jnp.float32),
        grid=grid,
        in_specs=[
            pl.BlockSpec(memory_space=pltpu.MemorySpace.SMEM),    # w (3, D)
            pl.BlockSpec(memory_space=pltpu.MemorySpace.SMEM),    # theta (3,)
            pl.BlockSpec((D, nbt, 128), lambda i: (0, i, 0)),     # x planes
            pl.BlockSpec((8, nbt, 128), lambda i: (0, i, 0)),     # rho planes
        ],
        out_specs=pl.BlockSpec((8, nbt, 128), lambda i: (0, i, 0)),
        compiler_params=pltpu.CompilerParams(
            dimension_semantics=("parallel",)),
    )(w.astype(jnp.float32), theta.astype(jnp.float32), x_p, rho_p)


def qlayer_forward(rho, x, w, theta):
    """rho: (B, 2, 2) complex64, x: (B, D) f32, w: (3, D) f32, theta: (3,) f32."""
    B, D = x.shape
    nbt, nB_pad = _plan_tiling(B)
    B_pad = nB_pad * 128

    x_f = x.astype(jnp.float32)
    rho_c = rho.astype(jnp.complex64)
    # complex64 -> interleaved f32 rows [re00, im00, re01, im01, re10, im10, re11, im11].
    # (lax.bitcast_convert_type rejects complex->float, so split real/imag.)
    rho_f = jnp.stack([jnp.real(rho_c), jnp.imag(rho_c)], axis=-1).reshape(B, 8)

    if B_pad != B:
        x_f = jnp.pad(x_f, ((0, B_pad - B), (0, 0)))
        rho_f = jnp.pad(rho_f, ((0, B_pad - B), (0, 0)))

    # Component-major planar layout: batch index -> (sublane-group, lane).
    x_p = x_f.reshape(nB_pad, 128, D).transpose(2, 0, 1)      # (D, nB_pad, 128)
    rho_p = rho_f.reshape(nB_pad, 128, 8).transpose(2, 0, 1)  # (8, nB_pad, 128)

    out_p = qlayer_forward_planar(rho_p, x_p, w, theta, nbt)  # (8, nB_pad, 128)

    out_f = out_p.transpose(1, 2, 0).reshape(B_pad, 8)[:B]    # (B, 8)
    out_ri = out_f.reshape(B, 2, 2, 2)
    return (out_ri[..., 0] + 1j * out_ri[..., 1]).astype(jnp.complex64)


def qlayer_reference(rho, x, w, theta):
    """Pure-JAX reference mirroring the PyTorch forward (for verification)."""
    phi = theta + jnp.einsum('ij,bj->bi', w, x)
    c = jnp.cos(phi[:, 0] / 2).astype(jnp.complex64)
    s = jnp.sin(phi[:, 0] / 2).astype(jnp.complex64)
    ep = jnp.exp(1j * (phi[:, 1] + phi[:, 2]) / 2)
    em = jnp.exp(1j * (phi[:, 1] - phi[:, 2]) / 2)
    U = jnp.stack([jnp.stack([c * ep, -s * em], axis=-1),
                   jnp.stack([s * jnp.conj(em), c * jnp.conj(ep)], axis=-1)],
                  axis=-2).astype(jnp.complex64)
    return jnp.einsum('bim,bmn,bjn->bij', U, rho, jnp.conj(U))


if __name__ == "__main__":
    def run_case(key, B, D):
        k_w, k_x, k_ar, k_ai = jax.random.split(key, 4)
        # Parameter init matching QLayer.init_parameters: w ~ N(0, sqrt(2/D)), theta = 0.
        w = (jax.random.normal(k_w, (3, D), dtype=jnp.float32)
             * jnp.sqrt(2.0 / D)).astype(jnp.float32)
        theta = jnp.zeros((3,), dtype=jnp.float32)

        # Inputs: x (B, D) and a valid density matrix rho = A A^dagger / tr(.)
        x = jax.random.normal(k_x, (B, D), dtype=jnp.float32)
        A = (jax.random.normal(k_ar, (B, 2, 2), dtype=jnp.float32)
             + 1j * jax.random.normal(k_ai, (B, 2, 2), dtype=jnp.float32)
             ).astype(jnp.complex64)
        rho = jnp.einsum('bik,bjk->bij', A, jnp.conj(A))
        tr = jnp.trace(rho, axis1=1, axis2=2)[:, None, None]
        rho = (rho / tr).astype(jnp.complex64)

        out = jax.block_until_ready(qlayer_forward(rho, x, w, theta))
        ref = qlayer_reference(rho, x, w, theta)
        assert out.shape == (B, 2, 2) and out.dtype == jnp.complex64
        assert jnp.allclose(out, ref, atol=1e-5, rtol=1e-5), f"mismatch (B={B}, D={D})"

    key = jax.random.PRNGKey(0)
    k1, k2 = jax.random.split(key)
    run_case(k1, B=8, D=3)      # module-default D=3, tiny batch (single block)
    run_case(k2, B=2500, D=3)   # ragged batch: 2-block grid + multi-chunk inner loop
    print("KERNEL_OK")
</pallas_src>

<mosaic_0001>
module attributes {stable_mosaic.version = 11 : i64} {
  func.func @qlayer_kernel(%arg0: i32, %arg1: memref<3x3xf32, #tpu.memory_space<smem>>, %arg2: memref<3xf32, #tpu.memory_space<smem>>, %arg3: memref<3x8x128xf32, #tpu.memory_space<vmem>>, %arg4: memref<8x8x128xf32, #tpu.memory_space<vmem>>, %arg5: memref<8x8x128xf32, #tpu.memory_space<vmem>>) attributes {dimension_semantics = [#tpu.dimension_semantics<parallel>], iteration_bounds = array<i64: 1>, scalar_prefetch = 0 : i64, scratch_operands = 0 : i64, tpu.core_type = #tpu.core_type<tc>, window_params = [{transform_indices = @transform_0, window_bounds = array<i64: 3, 3>}, {transform_indices = @transform_1, window_bounds = array<i64: 3>}, {transform_indices = @transform_2, window_bounds = array<i64: 3, 8, 128>}, {transform_indices = @transform_3, window_bounds = array<i64: 8, 8, 128>}, {transform_indices = @transform_4, window_bounds = array<i64: 8, 8, 128>}]} {
    %c0_i32 = arith.constant 0 : i32
    %c8_i32 = arith.constant 8 : i32
    %0 = arith.muli %c0_i32, %c8_i32 : i32
    %1 = tpu.assume_multiple %0, 8 : i32
    %c0 = arith.constant 0 : index
    %2 = arith.index_cast %1 : i32 to index
    %c0_0 = arith.constant 0 : index
    %3 = vector.load %arg3[%c0, %2, %c0_0] : memref<3x8x128xf32, #tpu.memory_space<vmem>>, vector<1x8x128xf32>
    %4 = vector.shape_cast %3 : vector<1x8x128xf32> to vector<8x128xf32>
    %c1 = arith.constant 1 : index
    %5 = arith.index_cast %1 : i32 to index
    %c0_1 = arith.constant 0 : index
    %6 = vector.load %arg3[%c1, %5, %c0_1] : memref<3x8x128xf32, #tpu.memory_space<vmem>>, vector<1x8x128xf32>
    %7 = vector.shape_cast %6 : vector<1x8x128xf32> to vector<8x128xf32>
    %c2 = arith.constant 2 : index
    %8 = arith.index_cast %1 : i32 to index
    %c0_2 = arith.constant 0 : index
    %9 = vector.load %arg3[%c2, %8, %c0_2] : memref<3x8x128xf32, #tpu.memory_space<vmem>>, vector<1x8x128xf32>
    %10 = vector.shape_cast %9 : vector<1x8x128xf32> to vector<8x128xf32>
    %c0_3 = arith.constant 0 : index
    %c0_4 = arith.constant 0 : index
    %11 = memref.load %arg1[%c0_3, %c0_4] : memref<3x3xf32, #tpu.memory_space<smem>>
    %12 = vector.broadcast %11 : f32 to vector<8x128xf32>
    %13 = arith.mulf %4, %12 : vector<8x128xf32>
    %c0_5 = arith.constant 0 : index
    %14 = memref.load %arg2[%c0_5] : memref<3xf32, #tpu.memory_space<smem>>
    %15 = vector.broadcast %14 : f32 to vector<8x128xf32>
    %16 = arith.addf %13, %15 : vector<8x128xf32>
    %c0_6 = arith.constant 0 : index
    %c1_7 = arith.constant 1 : index
    %17 = memref.load %arg1[%c0_6, %c1_7] : memref<3x3xf32, #tpu.memory_space<smem>>
    %18 = vector.broadcast %17 : f32 to vector<8x128xf32>
    %19 = arith.mulf %7, %18 : vector<8x128xf32>
    %20 = arith.addf %16, %19 : vector<8x128xf32>
    %c0_8 = arith.constant 0 : index
    %c2_9 = arith.constant 2 : index
    %21 = memref.load %arg1[%c0_8, %c2_9] : memref<3x3xf32, #tpu.memory_space<smem>>
    %22 = vector.broadcast %21 : f32 to vector<8x128xf32>
    %23 = arith.mulf %10, %22 : vector<8x128xf32>
    %24 = arith.addf %20, %23 : vector<8x128xf32>
    %c1_10 = arith.constant 1 : index
    %c0_11 = arith.constant 0 : index
    %25 = memref.load %arg1[%c1_10, %c0_11] : memref<3x3xf32, #tpu.memory_space<smem>>
    %26 = vector.broadcast %25 : f32 to vector<8x128xf32>
    %27 = arith.mulf %4, %26 : vector<8x128xf32>
    %c1_12 = arith.constant 1 : index
    %28 = memref.load %arg2[%c1_12] : memref<3xf32, #tpu.memory_space<smem>>
    %29 = vector.broadcast %28 : f32 to vector<8x128xf32>
    %30 = arith.addf %27, %29 : vector<8x128xf32>
    %c1_13 = arith.constant 1 : index
    %c1_14 = arith.constant 1 : index
    %31 = memref.load %arg1[%c1_13, %c1_14] : memref<3x3xf32, #tpu.memory_space<smem>>
    %32 = vector.broadcast %31 : f32 to vector<8x128xf32>
    %33 = arith.mulf %7, %32 : vector<8x128xf32>
    %34 = arith.addf %30, %33 : vector<8x128xf32>
    %c1_15 = arith.constant 1 : index
    %c2_16 = arith.constant 2 : index
    %35 = memref.load %arg1[%c1_15, %c2_16] : memref<3x3xf32, #tpu.memory_space<smem>>
    %36 = vector.broadcast %35 : f32 to vector<8x128xf32>
    %37 = arith.mulf %10, %36 : vector<8x128xf32>
    %38 = arith.addf %34, %37 : vector<8x128xf32>
    %c2_17 = arith.constant 2 : index
    %c0_18 = arith.constant 0 : index
    %39 = memref.load %arg1[%c2_17, %c0_18] : memref<3x3xf32, #tpu.memory_space<smem>>
    %40 = vector.broadcast %39 : f32 to vector<8x128xf32>
    %41 = arith.mulf %4, %40 : vector<8x128xf32>
    %c2_19 = arith.constant 2 : index
    %42 = memref.load %arg2[%c2_19] : memref<3xf32, #tpu.memory_space<smem>>
    %43 = vector.broadcast %42 : f32 to vector<8x128xf32>
    %44 = arith.addf %41, %43 : vector<8x128xf32>
    %c2_20 = arith.constant 2 : index
    %c1_21 = arith.constant 1 : index
    %45 = memref.load %arg1[%c2_20, %c1_21] : memref<3x3xf32, #tpu.memory_space<smem>>
    %46 = vector.broadcast %45 : f32 to vector<8x128xf32>
    %47 = arith.mulf %7, %46 : vector<8x128xf32>
    %48 = arith.addf %44, %47 : vector<8x128xf32>
    %c2_22 = arith.constant 2 : index
    %c2_23 = arith.constant 2 : index
    %49 = memref.load %arg1[%c2_22, %c2_23] : memref<3x3xf32, #tpu.memory_space<smem>>
    %50 = vector.broadcast %49 : f32 to vector<8x128xf32>
    %51 = arith.mulf %10, %50 : vector<8x128xf32>
    %52 = arith.addf %48, %51 : vector<8x128xf32>
    %cst = arith.constant 5.000000e-01 : f32
    %53 = vector.broadcast %cst : f32 to vector<8x128xf32>
    %54 = arith.mulf %24, %53 : vector<8x128xf32>
    %55 = math.cos %54 : vector<8x128xf32>
    %cst_24 = arith.constant 5.000000e-01 : f32
    %56 = vector.broadcast %cst_24 : f32 to vector<8x128xf32>
    %57 = arith.mulf %24, %56 : vector<8x128xf32>
    %58 = math.sin %57 : vector<8x128xf32>
    %59 = arith.addf %38, %52 : vector<8x128xf32>
    %cst_25 = arith.constant 5.000000e-01 : f32
    %60 = vector.broadcast %cst_25 : f32 to vector<8x128xf32>
    %61 = arith.mulf %59, %60 : vector<8x128xf32>
    %62 = arith.subf %38, %52 : vector<8x128xf32>
    %cst_26 = arith.constant 5.000000e-01 : f32
    %63 = vector.broadcast %cst_26 : f32 to vector<8x128xf32>
    %64 = arith.mulf %62, %63 : vector<8x128xf32>
    %65 = math.cos %61 : vector<8x128xf32>
    %66 = math.sin %61 : vector<8x128xf32>
    %67 = math.cos %64 : vector<8x128xf32>
    %68 = math.sin %64 : vector<8x128xf32>
    %69 = arith.mulf %55, %65 : vector<8x128xf32>
    %70 = arith.mulf %55, %66 : vector<8x128xf32>
    %cst_27 = arith.constant 0.000000e+00 : f32
    %71 = vector.broadcast %cst_27 : f32 to vector<8x128xf32>
    %72 = arith.subf %71, %58 : vector<8x128xf32>
    %73 = arith.mulf %72, %67 : vector<8x128xf32>
    %cst_28 = arith.constant 0.000000e+00 : f32
    %74 = vector.broadcast %cst_28 : f32 to vector<8x128xf32>
    %75 = arith.subf %74, %58 : vector<8x128xf32>
    %76 = arith.mulf %75, %68 : vector<8x128xf32>
    %77 = arith.mulf %58, %67 : vector<8x128xf32>
    %cst_29 = arith.constant 0.000000e+00 : f32
    %78 = vector.broadcast %cst_29 : f32 to vector<8x128xf32>
    %79 = arith.subf %78, %58 : vector<8x128xf32>
    %80 = arith.mulf %79, %68 : vector<8x128xf32>
    %cst_30 = arith.constant 0.000000e+00 : f32
    %81 = vector.broadcast %cst_30 : f32 to vector<8x128xf32>
    %82 = arith.subf %81, %70 : vector<8x128xf32>
    %c0_31 = arith.constant 0 : index
    %83 = arith.index_cast %1 : i32 to index
    %c0_32 = arith.constant 0 : index
    %84 = vector.load %arg4[%c0_31, %83, %c0_32] : memref<8x8x128xf32, #tpu.memory_space<vmem>>, vector<1x8x128xf32>
    %85 = vector.shape_cast %84 : vector<1x8x128xf32> to vector<8x128xf32>
    %c1_33 = arith.constant 1 : index
    %86 = arith.index_cast %1 : i32 to index
    %c0_34 = arith.constant 0 : index
    %87 = vector.load %arg4[%c1_33, %86, %c0_34] : memref<8x8x128xf32, #tpu.memory_space<vmem>>, vector<1x8x128xf32>
    %88 = vector.shape_cast %87 : vector<1x8x128xf32> to vector<8x128xf32>
    %c2_35 = arith.constant 2 : index
    %89 = arith.index_cast %1 : i32 to index
    %c0_36 = arith.constant 0 : index
    %90 = vector.load %arg4[%c2_35, %89, %c0_36] : memref<8x8x128xf32, #tpu.memory_space<vmem>>, vector<1x8x128xf32>
    %91 = vector.shape_cast %90 : vector<1x8x128xf32> to vector<8x128xf32>
    %c3 = arith.constant 3 : index
    %92 = arith.index_cast %1 : i32 to index
    %c0_37 = arith.constant 0 : index
    %93 = vector.load %arg4[%c3, %92, %c0_37] : memref<8x8x128xf32, #tpu.memory_space<vmem>>, vector<1x8x128xf32>
    %94 = vector.shape_cast %93 : vector<1x8x128xf32> to vector<8x128xf32>
    %c4 = arith.constant 4 : index
    %95 = arith.index_cast %1 : i32 to index
    %c0_38 = arith.constant 0 : index
    %96 = vector.load %arg4[%c4, %95, %c0_38] : memref<8x8x128xf32, #tpu.memory_space<vmem>>, vector<1x8x128xf32>
    %97 = vector.shape_cast %96 : vector<1x8x128xf32> to vector<8x128xf32>
    %c5 = arith.constant 5 : index
    %98 = arith.index_cast %1 : i32 to index
    %c0_39 = arith.constant 0 : index
    %99 = vector.load %arg4[%c5, %98, %c0_39] : memref<8x8x128xf32, #tpu.memory_space<vmem>>, vector<1x8x128xf32>
    %100 = vector.shape_cast %99 : vector<1x8x128xf32> to vector<8x128xf32>
    %c6 = arith.constant 6 : index
    %101 = arith.index_cast %1 : i32 to index
    %c0_40 = arith.constant 0 : index
    %102 = vector.load %arg4[%c6, %101, %c0_40] : memref<8x8x128xf32, #tpu.memory_space<vmem>>, vector<1x8x128xf32>
    %103 = vector.shape_cast %102 : vector<1x8x128xf32> to vector<8x128xf32>
    %c7 = arith.constant 7 : index
    %104 = arith.index_cast %1 : i32 to index
    %c0_41 = arith.constant 0 : index
    %105 = vector.load %arg4[%c7, %104, %c0_41] : memref<8x8x128xf32, #tpu.memory_space<vmem>>, vector<1x8x128xf32>
    %106 = vector.shape_cast %105 : vector<1x8x128xf32> to vector<8x128xf32>
    %107 = arith.mulf %69, %85 : vector<8x128xf32>
    %108 = arith.mulf %70, %88 : vector<8x128xf32>
    %109 = arith.subf %107, %108 : vector<8x128xf32>
    %110 = arith.mulf %69, %88 : vector<8x128xf32>
    %111 = arith.mulf %70, %85 : vector<8x128xf32>
    %112 = arith.addf %110, %111 : vector<8x128xf32>
    %113 = arith.mulf %73, %97 : vector<8x128xf32>
    %114 = arith.mulf %76, %100 : vector<8x128xf32>
    %115 = arith.subf %113, %114 : vector<8x128xf32>
    %116 = arith.mulf %73, %100 : vector<8x128xf32>
    %117 = arith.mulf %76, %97 : vector<8x128xf32>
    %118 = arith.addf %116, %117 : vector<8x128xf32>
    %119 = arith.addf %109, %115 : vector<8x128xf32>
    %120 = arith.addf %112, %118 : vector<8x128xf32>
    %121 = arith.mulf %69, %91 : vector<8x128xf32>
    %122 = arith.mulf %70, %94 : vector<8x128xf32>
    %123 = arith.subf %121, %122 : vector<8x128xf32>
    %124 = arith.mulf %69, %94 : vector<8x128xf32>
    %125 = arith.mulf %70, %91 : vector<8x128xf32>
    %126 = arith.addf %124, %125 : vector<8x128xf32>
    %127 = arith.mulf %73, %103 : vector<8x128xf32>
    %128 = arith.mulf %76, %106 : vector<8x128xf32>
    %129 = arith.subf %127, %128 : vector<8x128xf32>
    %130 = arith.mulf %73, %106 : vector<8x128xf32>
    %131 = arith.mulf %76, %103 : vector<8x128xf32>
    %132 = arith.addf %130, %131 : vector<8x128xf32>
    %133 = arith.addf %123, %129 : vector<8x128xf32>
    %134 = arith.addf %126, %132 : vector<8x128xf32>
    %135 = arith.mulf %77, %85 : vector<8x128xf32>
    %136 = arith.mulf %80, %88 : vector<8x128xf32>
    %137 = arith.subf %135, %136 : vector<8x128xf32>
    %138 = arith.mulf %77, %88 : vector<8x128xf32>
    %139 = arith.mulf %80, %85 : vector<8x128xf32>
    %140 = arith.addf %138, %139 : vector<8x128xf32>
    %141 = arith.mulf %69, %97 : vector<8x128xf32>
    %142 = arith.mulf %82, %100 : vector<8x128xf32>
    %143 = arith.subf %141, %142 : vector<8x128xf32>
    %144 = arith.mulf %69, %100 : vector<8x128xf32>
    %145 = arith.mulf %82, %97 : vector<8x128xf32>
    %146 = arith.addf %144, %145 : vector<8x128xf32>
    %147 = arith.addf %137, %143 : vector<8x128xf32>
    %148 = arith.addf %140, %146 : vector<8x128xf32>
    %149 = arith.mulf %77, %91 : vector<8x128xf32>
    %150 = arith.mulf %80, %94 : vector<8x128xf32>
    %151 = arith.subf %149, %150 : vector<8x128xf32>
    %152 = arith.mulf %77, %94 : vector<8x128xf32>
    %153 = arith.mulf %80, %91 : vector<8x128xf32>
    %154 = arith.addf %152, %153 : vector<8x128xf32>
    %155 = arith.mulf %69, %103 : vector<8x128xf32>
    %156 = arith.mulf %82, %106 : vector<8x128xf32>
    %157 = arith.subf %155, %156 : vector<8x128xf32>
    %158 = arith.mulf %69, %106 : vector<8x128xf32>
    %159 = arith.mulf %82, %103 : vector<8x128xf32>
    %160 = arith.addf %158, %159 : vector<8x128xf32>
    %161 = arith.addf %151, %157 : vector<8x128xf32>
    %162 = arith.addf %154, %160 : vector<8x128xf32>
    %163 = arith.mulf %119, %69 : vector<8x128xf32>
    %164 = arith.mulf %120, %70 : vector<8x128xf32>
    %165 = arith.addf %163, %164 : vector<8x128xf32>
    %166 = arith.mulf %120, %69 : vector<8x128xf32>
    %167 = arith.mulf %119, %70 : vector<8x128xf32>
    %168 = arith.subf %166, %167 : vector<8x128xf32>
    %169 = arith.mulf %133, %73 : vector<8x128xf32>
    %170 = arith.mulf %134, %76 : vector<8x128xf32>
    %171 = arith.addf %169, %170 : vector<8x128xf32>
    %172 = arith.mulf %134, %73 : vector<8x128xf32>
    %173 = arith.mulf %133, %76 : vector<8x128xf32>
    %174 = arith.subf %172, %173 : vector<8x128xf32>
    %175 = arith.addf %165, %171 : vector<8x128xf32>
    %176 = arith.addf %168, %174 : vector<8x128xf32>
    %177 = arith.mulf %119, %77 : vector<8x128xf32>
    %178 = arith.mulf %120, %80 : vector<8x128xf32>
    %179 = arith.addf %177, %178 : vector<8x128xf32>
    %180 = arith.mulf %120, %77 : vector<8x128xf32>
    %181 = arith.mulf %119, %80 : vector<8x128xf32>
    %182 = arith.subf %180, %181 : vector<8x128xf32>
    %183 = arith.mulf %133, %69 : vector<8x128xf32>
    %184 = arith.mulf %134, %82 : vector<8x128xf32>
    %185 = arith.addf %183, %184 : vector<8x128xf32>
    %186 = arith.mulf %134, %69 : vector<8x128xf32>
    %187 = arith.mulf %133, %82 : vector<8x128xf32>
    %188 = arith.subf %186, %187 : vector<8x128xf32>
    %189 = arith.addf %179, %185 : vector<8x128xf32>
    %190 = arith.addf %182, %188 : vector<8x128xf32>
    %191 = arith.mulf %147, %69 : vector<8x128xf32>
    %192 = arith.mulf %148, %70 : vector<8x128xf32>
    %193 = arith.addf %191, %192 : vector<8x128xf32>
    %194 = arith.mulf %148, %69 : vector<8x128xf32>
    %195 = arith.mulf %147, %70 : vector<8x128xf32>
    %196 = arith.subf %194, %195 : vector<8x128xf32>
    %197 = arith.mulf %161, %73 : vector<8x128xf32>
    %198 = arith.mulf %162, %76 : vector<8x128xf32>
    %199 = arith.addf %197, %198 : vector<8x128xf32>
    %200 = arith.mulf %162, %73 : vector<8x128xf32>
    %201 = arith.mulf %161, %76 : vector<8x128xf32>
    %202 = arith.subf %200, %201 : vector<8x128xf32>
    %203 = arith.addf %193, %199 : vector<8x128xf32>
    %204 = arith.addf %196, %202 : vector<8x128xf32>
    %205 = arith.mulf %147, %77 : vector<8x128xf32>
    %206 = arith.mulf %148, %80 : vector<8x128xf32>
    %207 = arith.addf %205, %206 : vector<8x128xf32>
    %208 = arith.mulf %148, %77 : vector<8x128xf32>
    %209 = arith.mulf %147, %80 : vector<8x128xf32>
    %210 = arith.subf %208, %209 : vector<8x128xf32>
    %211 = arith.mulf %161, %69 : vector<8x128xf32>
    %212 = arith.mulf %162, %82 : vector<8x128xf32>
    %213 = arith.addf %211, %212 : vector<8x128xf32>
    %214 = arith.mulf %162, %69 : vector<8x128xf32>
    %215 = arith.mulf %161, %82 : vector<8x128xf32>
    %216 = arith.subf %214, %215 : vector<8x128xf32>
    %217 = arith.addf %207, %213 : vector<8x128xf32>
    %218 = arith.addf %210, %216 : vector<8x128xf32>
    %c0_42 = arith.constant 0 : index
    %219 = arith.index_cast %1 : i32 to index
    %c0_43 = arith.constant 0 : index
    %220 = vector.load %arg5[%c0_42, %219, %c0_43] : memref<8x8x128xf32, #tpu.memory_space<vmem>>, vector<1x8x128xf32>
    %221 = vector.shape_cast %220 : vector<1x8x128xf32> to vector<8x128xf32>
    %222 = vector.shape_cast %175 : vector<8x128xf32> to vector<1x8x128xf32>
    tpu.vector_store %arg5[%c0_42, %219, %c0_43], %222 {strides = array<i32>} : memref<8x8x128xf32, #tpu.memory_space<vmem>>, vector<1x8x128xf32>,
    %c1_44 = arith.constant 1 : index
    %223 = arith.index_cast %1 : i32 to index
    %c0_45 = arith.constant 0 : index
    %224 = vector.load %arg5[%c1_44, %223, %c0_45] : memref<8x8x128xf32, #tpu.memory_space<vmem>>, vector<1x8x128xf32>
    %225 = vector.shape_cast %224 : vector<1x8x128xf32> to vector<8x128xf32>
    %226 = vector.shape_cast %176 : vector<8x128xf32> to vector<1x8x128xf32>
    tpu.vector_store %arg5[%c1_44, %223, %c0_45], %226 {strides = array<i32>} : memref<8x8x128xf32, #tpu.memory_space<vmem>>, vector<1x8x128xf32>,
    %c2_46 = arith.constant 2 : index
    %227 = arith.index_cast %1 : i32 to index
    %c0_47 = arith.constant 0 : index
    %228 = vector.load %arg5[%c2_46, %227, %c0_47] : memref<8x8x128xf32, #tpu.memory_space<vmem>>, vector<1x8x128xf32>
    %229 = vector.shape_cast %228 : vector<1x8x128xf32> to vector<8x128xf32>
    %230 = vector.shape_cast %189 : vector<8x128xf32> to vector<1x8x128xf32>
    tpu.vector_store %arg5[%c2_46, %227, %c0_47], %230 {strides = array<i32>} : memref<8x8x128xf32, #tpu.memory_space<vmem>>, vector<1x8x128xf32>,
    %c3_48 = arith.constant 3 : index
    %231 = arith.index_cast %1 : i32 to index
    %c0_49 = arith.constant 0 : index
    %232 = vector.load %arg5[%c3_48, %231, %c0_49] : memref<8x8x128xf32, #tpu.memory_space<vmem>>, vector<1x8x128xf32>
    %233 = vector.shape_cast %232 : vector<1x8x128xf32> to vector<8x128xf32>
    %234 = vector.shape_cast %190 : vector<8x128xf32> to vector<1x8x128xf32>
    tpu.vector_store %arg5[%c3_48, %231, %c0_49], %234 {strides = array<i32>} : memref<8x8x128xf32, #tpu.memory_space<vmem>>, vector<1x8x128xf32>,
    %c4_50 = arith.constant 4 : index
    %235 = arith.index_cast %1 : i32 to index
    %c0_51 = arith.constant 0 : index
    %236 = vector.load %arg5[%c4_50, %235, %c0_51] : memref<8x8x128xf32, #tpu.memory_space<vmem>>, vector<1x8x128xf32>
    %237 = vector.shape_cast %236 : vector<1x8x128xf32> to vector<8x128xf32>
    %238 = vector.shape_cast %203 : vector<8x128xf32> to vector<1x8x128xf32>
    tpu.vector_store %arg5[%c4_50, %235, %c0_51], %238 {strides = array<i32>} : memref<8x8x128xf32, #tpu.memory_space<vmem>>, vector<1x8x128xf32>,
    %c5_52 = arith.constant 5 : index
    %239 = arith.index_cast %1 : i32 to index
    %c0_53 = arith.constant 0 : index
    %240 = vector.load %arg5[%c5_52, %239, %c0_53] : memref<8x8x128xf32, #tpu.memory_space<vmem>>, vector<1x8x128xf32>
    %241 = vector.shape_cast %240 : vector<1x8x128xf32> to vector<8x128xf32>
    %242 = vector.shape_cast %204 : vector<8x128xf32> to vector<1x8x128xf32>
    tpu.vector_store %arg5[%c5_52, %239, %c0_53], %242 {strides = array<i32>} : memref<8x8x128xf32, #tpu.memory_space<vmem>>, vector<1x8x128xf32>,
    %c6_54 = arith.constant 6 : index
    %243 = arith.index_cast %1 : i32 to index
    %c0_55 = arith.constant 0 : index
    %244 = vector.load %arg5[%c6_54, %243, %c0_55] : memref<8x8x128xf32, #tpu.memory_space<vmem>>, vector<1x8x128xf32>
    %245 = vector.shape_cast %244 : vector<1x8x128xf32> to vector<8x128xf32>
    %246 = vector.shape_cast %217 : vector<8x128xf32> to vector<1x8x128xf32>
    tpu.vector_store %arg5[%c6_54, %243, %c0_55], %246 {strides = array<i32>} : memref<8x8x128xf32, #tpu.memory_space<vmem>>, vector<1x8x128xf32>,
    %c7_56 = arith.constant 7 : index
    %247 = arith.index_cast %1 : i32 to index
    %c0_57 = arith.constant 0 : index
    %248 = vector.load %arg5[%c7_56, %247, %c0_57] : memref<8x8x128xf32, #tpu.memory_space<vmem>>, vector<1x8x128xf32>
    %249 = vector.shape_cast %248 : vector<1x8x128xf32> to vector<8x128xf32>
    %250 = vector.shape_cast %218 : vector<8x128xf32> to vector<1x8x128xf32>
    tpu.vector_store %arg5[%c7_56, %247, %c0_57], %250 {strides = array<i32>} : memref<8x8x128xf32, #tpu.memory_space<vmem>>, vector<1x8x128xf32>,
    %c1_i32 = arith.constant 1 : i32
    return
  }
  func.func @transform_0(%arg0: i32) -> (i32, i32) {
    %c0_i32 = arith.constant 0 : i32
    %c0_i32_0 = arith.constant 0 : i32
    %c0_i32_1 = arith.constant 0 : i32
    return %c0_i32, %c0_i32_0 : i32, i32
  }
  func.func @transform_1(%arg0: i32) -> i32 {
    %c0_i32 = arith.constant 0 : i32
    %c0_i32_0 = arith.constant 0 : i32
    return %c0_i32 : i32
  }
  func.func @transform_2(%arg0: i32) -> (i32, i32, i32) {
    %c0_i32 = arith.constant 0 : i32
    %c0_i32_0 = arith.constant 0 : i32
    %c0_i32_1 = arith.constant 0 : i32
    return %c0_i32, %arg0, %c0_i32_0 : i32, i32, i32
  }
  func.func @transform_3(%arg0: i32) -> (i32, i32, i32) {
    %c0_i32 = arith.constant 0 : i32
    %c0_i32_0 = arith.constant 0 : i32
    %c0_i32_1 = arith.constant 0 : i32
    return %c0_i32, %arg0, %c0_i32_0 : i32, i32, i32
  }
  func.func @transform_4(%arg0: i32) -> (i32, i32, i32) {
    %c0_i32 = arith.constant 0 : i32
    %c0_i32_0 = arith.constant 0 : i32
    %c0_i32_1 = arith.constant 0 : i32
    return %c0_i32, %arg0, %c0_i32_0 : i32, i32, i32
  }
}

</mosaic_0001>

<llo_original>
// kernel: tpu_custom_call.1
$region0: #{tpu_custom_call.1}
  #allocation0 [shape = 'u32[]', space=smem, size = 0x4, offset = 0x4, fixed_abs, tag = 'smem constant byte address 0x4 - core index']
  #allocation1 [shape = 'u32[72,128]{1,0:T(1,128)}', space=vmem, size = 0x9000, scoped, tag = 'internal scratch']
  %s0 = inlined_call_operand.hbm [shape: f32[3,3], index: 0, kind: input, shape index: {}]
  %s1 = inlined_call_operand.hbm [shape: f32[3], index: 1, kind: input, shape index: {}]
  %s2 = inlined_call_operand.hbm [shape: f32[3,8,128], index: 2, kind: input, shape index: {}]
  %s3 = inlined_call_operand.hbm [shape: f32[8,8,128], index: 3, kind: input, shape index: {}]
  %s4 = inlined_call_operand.hbm [shape: f32[8,8,128], index: 4, kind: output, shape index: {}]
  %s5 = sld [smem:[#allocation0]]
  $region42: #{tpu_custom_call.1} parent=0
    _
  %s7 = ssub.s32 1, %s5
  %s8 = scalar_select 0, %s7, %s5
  $region1: #{tpu_custom_call.1} parent=0
    #allocation2 [shape = 'u8[2048]{0}', space=smem, size = 0x800, scoped, tag = 'input window, operand 0, single buffered']
    #allocation3 [shape = 's32[1]{0}', space=sflag, size = 0x4, scoped, tag = 'scoped memory for tpu_custom_call.1']
    #allocation4 [shape = 's32[1]{0}', space=sflag, size = 0x4, scoped, tag = 'scoped memory for tpu_custom_call.1']
    #allocation5 [shape = 's32[1]{0}', space=sflag, size = 0x4, scoped, tag = 'scoped memory for tpu_custom_call.1']
    #allocation6 [shape = 'u8[512]{0}', space=smem, size = 0x200, scoped, tag = 'input window, operand 1, single buffered']
    #allocation7 [shape = 's32[1]{0}', space=sflag, size = 0x4, scoped, tag = 'scoped memory for tpu_custom_call.1']
    #allocation8 [shape = 'u8[12288]{0}', space=vmem, size = 0x3000, scoped, tag = 'input window, operand 2, single buffered']
    #allocation9 [shape = 'u8[32768]{0}', space=vmem, size = 0x8000, scoped, tag = 'input window, operand 3, single buffered']
    #allocation10 [shape = 's32[1]{0}', space=sflag, size = 0x4, scoped, tag = 'scoped memory for tpu_custom_call.1']
    #allocation11 [shape = 'u8[32768]{0}', space=vmem, size = 0x8000, scoped, tag = 'output window, operand 0, single buffered']
    %9 = vsyncpa [#allocation5], 0
    %10 = vsyncpa [#allocation7], 0
    %11 = vsyncpa [#allocation3], 0
    %12 = vsyncpa [#allocation10], 0
    %13 = vsyncpa [#allocation4], 0
    // Predicated region
    $region2: #{tpu_custom_call.1} parent=1 // pred_check
      _
    $region3: #{tpu_custom_call.1} parent=1 // pred_check_branch
      %15 = sbr.rel (0) target = $region5
    $region4: #{tpu_custom_call.1} parent=1 // pred_region
      %17 = vsyncadd [#allocation5], 0
      %s19 = sshll.u32 %s0, 4
      %s20 = int_to_ptr.hbm [resolvable:$true] %s19
      %22 = dma.hbm_to_smem %s20, 64, [#allocation2], [#allocation5]
    $region5: #{tpu_custom_call.1} parent=1 // pred_fallthru
      _
    // Predicated region
    $region6: #{tpu_custom_call.1} parent=1 // pred_check
      _
    $region7: #{tpu_custom_call.1} parent=1 // pred_check_branch
      %24 = sbr.rel (0) target = $region9
    $region8: #{tpu_custom_call.1} parent=1 // pred_region
      %26 = vsyncadd [#allocation7], 0
      %s28 = sshll.u32 %s1, 4
      %s29 = int_to_ptr.hbm [resolvable:$true] %s28
      %31 = dma.hbm_to_smem %s29, 16, [#allocation6], [#allocation7]
    $region9: #{tpu_custom_call.1} parent=1 // pred_fallthru
      _
    // Predicated region
    $region10: #{tpu_custom_call.1} parent=1 // pred_check
      _
    $region11: #{tpu_custom_call.1} parent=1 // pred_check_branch
      %33 = sbr.rel (0) target = $region13
    $region12: #{tpu_custom_call.1} parent=1 // pred_region
      %35 = vsyncadd [#allocation3], 0
      %s36 = sshll.u32 %s2, 4
      %s37 = int_to_ptr.hbm [resolvable:$true] %s36
      %s38 = sshll.u32 [#allocation8], 4
      %s39 = int_to_ptr.vmem [resolvable:$true] %s38
      %44 = dma.hbm_to_vmem [thread:$0]  %s37, 384, %s39, [#allocation3], 128, 128, 8
    $region13: #{tpu_custom_call.1} parent=1 // pred_fallthru
      _
    // Predicated region
    $region14: #{tpu_custom_call.1} parent=1 // pred_check
      _
    $region15: #{tpu_custom_call.1} parent=1 // pred_check_branch
      %46 = sbr.rel (0) target = $region17
    $region16: #{tpu_custom_call.1} parent=1 // pred_region
      %48 = vsyncadd [#allocation10], 0
      %s49 = sshll.u32 %s3, 4
      %s50 = int_to_ptr.hbm [resolvable:$true] %s49
      %s51 = sshll.u32 [#allocation9], 4
      %s52 = int_to_ptr.vmem [resolvable:$true] %s51
      %57 = dma.hbm_to_vmem [thread:$0]  %s50, 1024, %s52, [#allocation10], 128, 128, 8
    $region17: #{tpu_custom_call.1} parent=1 // pred_fallthru
      _
    // Predicated region
    $region18: #{tpu_custom_call.1} parent=1 // pred_check
      _
    $region19: #{tpu_custom_call.1} parent=1 // pred_check_branch
      %59 = sbr.rel (0) target = $region21
    $region20: #{tpu_custom_call.1} parent=1 // pred_region
      %61 = dma.done [#allocation5], 64
    $region21: #{tpu_custom_call.1} parent=1 // pred_fallthru
      _
    // Predicated region
    $region22: #{tpu_custom_call.1} parent=1 // pred_check
      _
    $region23: #{tpu_custom_call.1} parent=1 // pred_check_branch
      %63 = sbr.rel (0) target = $region25
    $region24: #{tpu_custom_call.1} parent=1 // pred_region
      %65 = dma.done [#allocation7], 16
    $region25: #{tpu_custom_call.1} parent=1 // pred_fallthru
      _
    // Predicated region
    $region26: #{tpu_custom_call.1} parent=1 // pred_check
      _
    $region27: #{tpu_custom_call.1} parent=1 // pred_check_branch
      %67 = sbr.rel (0) target = $region29
    $region28: #{tpu_custom_call.1} parent=1 // pred_region
      %69 = dma.done [#allocation3], 384
    $region29: #{tpu_custom_call.1} parent=1 // pred_fallthru
      _
    // Predicated region
    $region30: #{tpu_custom_call.1} parent=1 // pred_check
      _
    $region31: #{tpu_custom_call.1} parent=1 // pred_check_branch
      %71 = sbr.rel (0) target = $region33
    $region32: #{tpu_custom_call.1} parent=1 // pred_region
      %73 = dma.done [#allocation10], 1024
    $region33: #{tpu_custom_call.1} parent=1 // pred_fallthru
      _
    %74 = sfence
    %v75 = vld [vmem:[#allocation8] sm:$0xff]
    %s76 = sadd.s32 0, 8
    %s77 = scalar_lea.vmem [#allocation8], %s76
    %v78 = vld [vmem:[%s77] sm:$0xff]
    %s79 = sadd.s32 0, 16
    %s80 = scalar_lea.vmem [#allocation8], %s79
    %v81 = vld [vmem:[%s80] sm:$0xff]
    %s82 = sld [smem:[#allocation2]]
    %v83 = vstv %s82
    %v84 = vmul.f32 %v75, %v83
    %s85 = sld [smem:[#allocation6]]
    %v86 = vstv %s85
    %v87 = vadd.f32 %v84, %v86
    %s88 = sld [smem:[#allocation2 + $0x1]]
    %v89 = vstv %s88
    %v90 = vmul.f32 %v78, %v89
    %v91 = vadd.f32 %v87, %v90
    %s92 = sld [smem:[#allocation2 + $0x2]]
    %v93 = vstv %s92
    %v94 = vmul.f32 %v81, %v93
    %v95 = vadd.f32 %v91, %v94
    %s96 = sld [smem:[#allocation2 + $0x80]]
    %v97 = vstv %s96
    %v98 = vmul.f32 %v75, %v97
    %s99 = sld [smem:[#allocation6 + $0x1]]
    %v100 = vstv %s99
    %v101 = vadd.f32 %v98, %v100
    %s102 = sld [smem:[#allocation2 + $0x81]]
    %v103 = vstv %s102
    %v104 = vmul.f32 %v78, %v103
    %v105 = vadd.f32 %v101, %v104
    %s106 = sld [smem:[#allocation2 + $0x82]]
    %v107 = vstv %s106
    %v108 = vmul.f32 %v81, %v107
    %v109 = vadd.f32 %v105, %v108
    %s110 = sld [smem:[#allocation2 + $0x100]]
    %v111 = vstv %s110
    %v112 = vmul.f32 %v75, %v111
    %s113 = sld [smem:[#allocation6 + $0x2]]
    %v114 = vstv %s113
    %v115 = vadd.f32 %v112, %v114
    %s116 = sld [smem:[#allocation2 + $0x101]]
    %v117 = vstv %s116
    %v118 = vmul.f32 %v78, %v117
    %v119 = vadd.f32 %v115, %v118
    %s120 = sld [smem:[#allocation2 + $0x102]]
    %v121 = vstv %s120
    %v122 = vmul.f32 %v81, %v121
    %v123 = vadd.f32 %v119, %v122
    %v124 = vmul.f32 %v95, 0.5
    %v125 = vand.u32 2147483647, %v124
    %vm126 = vcmp.le.f32.partialorder %v125, 0.7853982
    %vm127 = vcmp.lt.s32.totalorder %v124, 0
    %v128 = vand.u32 %v124, 2139095040
    %v129 = vshrl.u32 %v128, 23
    %v130 = vsub.s32 %v129, 127
    %v131 = vand.u32 2147483647, %v124
    %v132 = vand.u32 %v131, 8388607
    %v133 = vor.u32 %v132, 8388608
    %v134 = vsub.s32 0, %v133
    %v135 = vadd.s32 %v130, 1
    %vm136 = vcmp.gt.s32.totalorder %v135, 0
    %v137 = vsel %vm136, %v135, 0
    %v138 = vshrl.u32 %v137, 5
    %v139 = vand.u32 %v137, 31
    %v140 = vsub.s32 32, %v139
    %v141 = vshrl.u32 683565275, %v140
    %v142 = vshll.u32 683565275, %v139
    %v143 = vshrl.u32 2475754826, %v140
    %v144 = vor.u32 %v142, %v143
    %v145 = vshll.u32 2475754826, %v139
    %v146 = vshrl.u32 2131351028, %v140
    %v147 = vor.u32 %v145, %v146
    %v148 = vshll.u32 2131351028, %v139
    %v149 = vshrl.u32 2102212464, %v140
    %v150 = vor.u32 %v148, %v149
    %v151 = vshll.u32 2102212464, %v139
    %v152 = vshrl.u32 920167782, %v140
    %v153 = vor.u32 %v151, %v152
    %v154 = vshll.u32 920167782, %v139
    %v155 = vshrl.u32 1326507024, %v140
    %v156 = vor.u32 %v154, %v155
    %vm157 = vcmp.lt.s32.totalorder %v138, 1
    %vm158 = vcmp.lt.s32.totalorder %v138, 2
    %vm159 = vcmp.lt.s32.totalorder %v138, 3
    %vm160 = vcmp.lt.s32.totalorder %v138, 4
    %v161 = vsel %vm157, %v141, %v144
    %v162 = vsel %vm160, %v150, 2102212464
    %v163 = vsel %vm159, %v147, %v162
    %v164 = vsel %vm158, %v161, %v163
    %v165 = vsel %vm157, %v144, %v147
    %v166 = vsel %vm160, %v153, 920167782
    %v167 = vsel %vm159, %v150, %v166
    %v168 = vsel %vm158, %v165, %v167
    %v169 = vsel %vm157, %v147, %v150
    %v170 = vsel %vm160, %v156, 1326507024
    %v171 = vsel %vm159, %v153, %v170
    %v172 = vsel %vm158, %v169, %v171
    %v173 = vshll.u32 %v133, 8
    %v174 = vand.u32 %v173, 65535
    %v175 = vshrl.u32 %v173, 16
    %v176 = vand.u32 %v172, 65535
    %v177 = vshrl.u32 %v172, 16
    %v178 = vmul.u32 %v174, %v176
    %v179 = vmul.u32 %v174, %v177
    %v180 = vmul.u32 %v175, %v176
    %v181 = vmul.u32 %v175, %v177
    %v182 = vshll.u32 %v179, 16
    %v183 = vshrl.u32 %v179, 16
    %v184 = vshll.u32 %v180, 16
    %v185 = vshrl.u32 %v180, 16
    %vm186 = vc.u32 %v178, %v182
    %v187 = vsel %vm186, 1, 0
    %v188 = vadd.s32 %v178, %v182
    %v189 = vadd.s32 %v181, %v187
    %vm190 = vc.u32 %v188, %v184
    %v191 = vsel %vm190, 1, 0
    %v192 = vadd.s32 %v188, %v184
    %v193 = vadd.s32 %v189, %v191
    %v194 = vadd.s32 %v193, %v183
    %v195 = vadd.s32 %v194, %v185
    %v196 = vand.u32 %v173, 65535
    %v197 = vshrl.u32 %v173, 16
    %v198 = vand.u32 %v168, 65535
    %v199 = vshrl.u32 %v168, 16
    %v200 = vmul.u32 %v196, %v198
    %v201 = vmul.u32 %v196, %v199
    %v202 = vmul.u32 %v197, %v198
    %v203 = vmul.u32 %v197, %v199
    %v204 = vshll.u32 %v201, 16
    %v205 = vshrl.u32 %v201, 16
    %v206 = vshll.u32 %v202, 16
    %v207 = vshrl.u32 %v202, 16
    %vm208 = vc.u32 %v200, %v204
    %v209 = vsel %vm208, 1, 0
    %v210 = vadd.s32 %v200, %v204
    %v211 = vadd.s32 %v203, %v209
    %vm212 = vc.u32 %v210, %v206
    %v213 = vsel %vm212, 1, 0
    %v214 = vadd.s32 %v210, %v206
    %v215 = vadd.s32 %v211, %v213
    %v216 = vadd.s32 %v215, %v205
    %v217 = vadd.s32 %v216, %v207
    %v218 = vmul.u32 %v173, %v164
    %v219 = vadd.s32 %v195, %v214
    %vm220 = vc.u32 %v195, %v214
    %v221 = vadd.s32 %v217, 1
    %v222 = vsel %vm220, %v221, %v217
    %v223 = vadd.s32 %v218, %v222
    %v224 = vadd.s32 %v223, 536870912
    %v225 = vshrl.u32 %v224, 30
    %v226 = vshll.u32 %v225, 30
    %v227 = vsub.s32 %v223, %v226
    %vm228 = vcmp.lt.s32.totalorder %v227, 0
    %v229 = vsub.s32 0, %v227
    %v230 = vsel %vm228, %v229, %v227
    %v231 = vclz %v230
    %v232 = vsub.s32 %v231, 2
    %vm233 = vcmp.gt.s32.totalorder 0, %v232
    %v234 = vsel %vm233, 0, %v232
    %v235 = vsub.s32 32, %v234
    %v236 = vshll.u32 %v227, %v234
    %v237 = vshrl.u32 %v219, %v235
    %v238 = vor.u32 %v236, %v237
    %v239 = vsub.s32 4294967266, %v234
    %v240 = vadd.s32 %v239, 127
    %v241 = vshll.u32 %v240, 23
    %v242 = vor.u32 4788187, %v241
    %v243 = vand.u32 2147483647, %v242
    %v245 = vcvt.s32.f32 %v238
    %v246 = vmul.f32 %v245, %v243
    %v247 = vxor.u32 %v246, 2147483648
    %v248 = vsel %vm127, %v247, %v246
    %v249 = vsub.s32 4, %v225
    %v250 = vsel %vm127, %v249, %v225
    %v251 = vsel %vm126, %v124, %v248
    %v252 = vsel %vm126, 0, %v250
    %v253 = vmul.f32 %v251, %v251
    %v254 = vmul.f32 %v253, -0.001358992
    %v255 = vadd.f32 %v254, 0.041655596
    %v256 = vmul.f32 %v253, %v255
    %v257 = vadd.f32 %v256, -0.4999988
    %v258 = vmul.f32 %v253, %v257
    %v259 = vadd.f32 1.0, %v258
    %v260 = vmul.f32 %v251, %v251
    %v261 = vmul.f32 %v260, -0.00019511016
    %v262 = vadd.f32 %v261, 0.008332121
    %v263 = vmul.f32 %v260, %v262
    %v264 = vadd.f32 %v263, -0.16666654
    %v265 = vmul.f32 %v260, %v264
    %v266 = vadd.f32 %v265, 1.0
    %v267 = vmul.f32 %v266, %v251
    %vm268 = vweird.f32 %v124
    %v269 = vand.u32 %v252, 3
    %vm270 = vcmp.lt.s32.totalorder %v269, 2
    %vm271 = vcmp.eq.s32.totalorder %v269, 0
    %v272 = vxor.u32 %v267, 2147483648
    %v273 = vsel %vm271, %v259, %v272
    %vm274 = vcmp.eq.s32.totalorder %v269, 2
    %v275 = vxor.u32 %v259, 2147483648
    %v276 = vsel %vm274, %v275, %v267
    %v277 = vsel %vm270, %v273, %v276
    %v278 = vsel %vm268, nan, %v277
    %v279 = vand.u32 2147483647, %v124
    %vm280 = vcmp.le.f32.partialorder %v279, 0.7853982
    %vm281 = vcmp.lt.s32.totalorder %v124, 0
    %v282 = vand.u32 %v124, 2139095040
    %v283 = vshrl.u32 %v282, 23
    %v284 = vsub.s32 %v283, 127
    %v285 = vand.u32 2147483647, %v124
    %v286 = vand.u32 %v285, 8388607
    %v287 = vor.u32 %v286, 8388608
    %v288 = vsub.s32 0, %v287
    %v289 = vadd.s32 %v284, 1
    %vm290 = vcmp.gt.s32.totalorder %v289, 0
    %v291 = vsel %vm290, %v289, 0
    %v292 = vshrl.u32 %v291, 5
    %v293 = vand.u32 %v291, 31
    %v294 = vsub.s32 32, %v293
    %v295 = vshrl.u32 683565275, %v294
    %v296 = vshll.u32 683565275, %v293
    %v297 = vshrl.u32 2475754826, %v294
    %v298 = vor.u32 %v296, %v297
    %v299 = vshll.u32 2475754826, %v293
    %v300 = vshrl.u32 2131351028, %v294
    %v301 = vor.u32 %v299, %v300
    %v302 = vshll.u32 2131351028, %v293
    %v303 = vshrl.u32 2102212464, %v294
    %v304 = vor.u32 %v302, %v303
    %v305 = vshll.u32 2102212464, %v293
    %v306 = vshrl.u32 920167782, %v294
    %v307 = vor.u32 %v305, %v306
    %v308 = vshll.u32 920167782, %v293
    %v309 = vshrl.u32 1326507024, %v294
    %v310 = vor.u32 %v308, %v309
    %vm311 = vcmp.lt.s32.totalorder %v292, 1
    %vm312 = vcmp.lt.s32.totalorder %v292, 2
    %vm313 = vcmp.lt.s32.totalorder %v292, 3
    %vm314 = vcmp.lt.s32.totalorder %v292, 4
    %v315 = vsel %vm311, %v295, %v298
    %v316 = vsel %vm314, %v304, 2102212464
    %v317 = vsel %vm313, %v301, %v316
    %v318 = vsel %vm312, %v315, %v317
    %v319 = vsel %vm311, %v298, %v301
    %v320 = vsel %vm314, %v307, 920167782
    %v321 = vsel %vm313, %v304, %v320
    %v322 = vsel %vm312, %v319, %v321
    %v323 = vsel %vm311, %v301, %v304
    %v324 = vsel %vm314, %v310, 1326507024
    %v325 = vsel %vm313, %v307, %v324
    %v326 = vsel %vm312, %v323, %v325
    %v327 = vshll.u32 %v287, 8
    %v328 = vand.u32 %v327, 65535
    %v329 = vshrl.u32 %v327, 16
    %v330 = vand.u32 %v326, 65535
    %v331 = vshrl.u32 %v326, 16
    %v332 = vmul.u32 %v328, %v330
    %v333 = vmul.u32 %v328, %v331
    %v334 = vmul.u32 %v329, %v330
    %v335 = vmul.u32 %v329, %v331
    %v336 = vshll.u32 %v333, 16
    %v337 = vshrl.u32 %v333, 16
    %v338 = vshll.u32 %v334, 16
    %v339 = vshrl.u32 %v334, 16
    %vm340 = vc.u32 %v332, %v336
    %v341 = vsel %vm340, 1, 0
    %v342 = vadd.s32 %v332, %v336
    %v343 = vadd.s32 %v335, %v341
    %vm344 = vc.u32 %v342, %v338
    %v345 = vsel %vm344, 1, 0
    %v346 = vadd.s32 %v342, %v338
    %v347 = vadd.s32 %v343, %v345
    %v348 = vadd.s32 %v347, %v337
    %v349 = vadd.s32 %v348, %v339
    %v350 = vand.u32 %v327, 65535
    %v351 = vshrl.u32 %v327, 16
    %v352 = vand.u32 %v322, 65535
    %v353 = vshrl.u32 %v322, 16
    %v354 = vmul.u32 %v350, %v352
    %v355 = vmul.u32 %v350, %v353
    %v356 = vmul.u32 %v351, %v352
    %v357 = vmul.u32 %v351, %v353
    %v358 = vshll.u32 %v355, 16
    %v359 = vshrl.u32 %v355, 16
    %v360 = vshll.u32 %v356, 16
    %v361 = vshrl.u32 %v356, 16
    %vm362 = vc.u32 %v354, %v358
    %v363 = vsel %vm362, 1, 0
    %v364 = vadd.s32 %v354, %v358
    %v365 = vadd.s32 %v357, %v363
    %vm366 = vc.u32 %v364, %v360
    %v367 = vsel %vm366, 1, 0
    %v368 = vadd.s32 %v364, %v360
    %v369 = vadd.s32 %v365, %v367
    %v370 = vadd.s32 %v369, %v359
    %v371 = vadd.s32 %v370, %v361
    %v372 = vmul.u32 %v327, %v318
    %v373 = vadd.s32 %v349, %v368
    %vm374 = vc.u32 %v349, %v368
    %v375 = vadd.s32 %v371, 1
    %v376 = vsel %vm374, %v375, %v371
    %v377 = vadd.s32 %v372, %v376
    %v378 = vadd.s32 %v377, 536870912
    %v379 = vshrl.u32 %v378, 30
    %v380 = vshll.u32 %v379, 30
    %v381 = vsub.s32 %v377, %v380
    %vm382 = vcmp.lt.s32.totalorder %v381, 0
    %v383 = vsub.s32 0, %v381
    %v384 = vsel %vm382, %v383, %v381
    %v385 = vclz %v384
    %v386 = vsub.s32 %v385, 2
    %vm387 = vcmp.gt.s32.totalorder 0, %v386
    %v388 = vsel %vm387, 0, %v386
    %v389 = vsub.s32 32, %v388
    %v390 = vshll.u32 %v381, %v388
    %v391 = vshrl.u32 %v373, %v389
    %v392 = vor.u32 %v390, %v391
    %v393 = vsub.s32 4294967266, %v388
    %v394 = vadd.s32 %v393, 127
    %v395 = vshll.u32 %v394, 23
    %v396 = vor.u32 4788187, %v395
    %v397 = vand.u32 2147483647, %v396
    %v399 = vcvt.s32.f32 %v392
    %v400 = vmul.f32 %v399, %v397
    %v401 = vxor.u32 %v400, 2147483648
    %v402 = vsel %vm281, %v401, %v400
    %v403 = vsub.s32 4, %v379
    %v404 = vsel %vm281, %v403, %v379
    %v405 = vsel %vm280, %v124, %v402
    %v406 = vsel %vm280, 0, %v404
    %v407 = vmul.f32 %v405, %v405
    %v408 = vmul.f32 %v407, -0.001358992
    %v409 = vadd.f32 %v408, 0.041655596
    %v410 = vmul.f32 %v407, %v409
    %v411 = vadd.f32 %v410, -0.4999988
    %v412 = vmul.f32 %v407, %v411
    %v413 = vadd.f32 1.0, %v412
    %v414 = vmul.f32 %v405, %v405
    %v415 = vmul.f32 %v414, -0.00019511016
    %v416 = vadd.f32 %v415, 0.008332121
    %v417 = vmul.f32 %v414, %v416
    %v418 = vadd.f32 %v417, -0.16666654
    %v419 = vmul.f32 %v414, %v418
    %v420 = vadd.f32 %v419, 1.0
    %v421 = vmul.f32 %v420, %v405
    %vm422 = vweird.f32 %v124
    %v423 = vadd.s32 %v406, 3
    %v424 = vand.u32 %v423, 3
    %vm425 = vcmp.lt.s32.totalorder %v424, 2
    %vm426 = vcmp.eq.s32.totalorder %v424, 0
    %v427 = vxor.u32 %v421, 2147483648
    %v428 = vsel %vm426, %v413, %v427
    %vm429 = vcmp.eq.s32.totalorder %v424, 2
    %v430 = vxor.u32 %v413, 2147483648
    %v431 = vsel %vm429, %v430, %v421
    %v432 = vsel %vm425, %v428, %v431
    %v433 = vsel %vm422, nan, %v432
    %v434 = vadd.f32 %v109, %v123
    %v435 = vmul.f32 %v434, 0.5
    %v436 = vsub.f32 %v109, %v123
    %v437 = vmul.f32 %v436, 0.5
    %v438 = vand.u32 2147483647, %v435
    %vm439 = vcmp.le.f32.partialorder %v438, 0.7853982
    %vm440 = vcmp.lt.s32.totalorder %v435, 0
    %v441 = vand.u32 %v435, 2139095040
    %v442 = vshrl.u32 %v441, 23
    %v443 = vsub.s32 %v442, 127
    %v444 = vand.u32 2147483647, %v435
    %v445 = vand.u32 %v444, 8388607
    %v446 = vor.u32 %v445, 8388608
    %v447 = vsub.s32 0, %v446
    %v448 = vadd.s32 %v443, 1
    %vm449 = vcmp.gt.s32.totalorder %v448, 0
    %v450 = vsel %vm449, %v448, 0
    %v451 = vshrl.u32 %v450, 5
    %v452 = vand.u32 %v450, 31
    %v453 = vsub.s32 32, %v452
    %v454 = vshrl.u32 683565275, %v453
    %v455 = vshll.u32 683565275, %v452
    %v456 = vshrl.u32 2475754826, %v453
    %v457 = vor.u32 %v455, %v456
    %v458 = vshll.u32 2475754826, %v452
    %v459 = vshrl.u32 2131351028, %v453
    %v460 = vor.u32 %v458, %v459
    %v461 = vshll.u32 2131351028, %v452
    %v462 = vshrl.u32 2102212464, %v453
    %v463 = vor.u32 %v461, %v462
    %v464 = vshll.u32 2102212464, %v452
    %v465 = vshrl.u32 920167782, %v453
    %v466 = vor.u32 %v464, %v465
    %v467 = vshll.u32 920167782, %v452
    %v468 = vshrl.u32 1326507024, %v453
    %v469 = vor.u32 %v467, %v468
    %vm470 = vcmp.lt.s32.totalorder %v451, 1
    %vm471 = vcmp.lt.s32.totalorder %v451, 2
    %vm472 = vcmp.lt.s32.totalorder %v451, 3
    %vm473 = vcmp.lt.s32.totalorder %v451, 4
    %v474 = vsel %vm470, %v454, %v457
    %v475 = vsel %vm473, %v463, 2102212464
    %v476 = vsel %vm472, %v460, %v475
    %v477 = vsel %vm471, %v474, %v476
    %v478 = vsel %vm470, %v457, %v460
    %v479 = vsel %vm473, %v466, 920167782
    %v480 = vsel %vm472, %v463, %v479
    %v481 = vsel %vm471, %v478, %v480
    %v482 = vsel %vm470, %v460, %v463
    %v483 = vsel %vm473, %v469, 1326507024
    %v484 = vsel %vm472, %v466, %v483
    %v485 = vsel %vm471, %v482, %v484
    %v486 = vshll.u32 %v446, 8
    %v487 = vand.u32 %v486, 65535
    %v488 = vshrl.u32 %v486, 16
    %v489 = vand.u32 %v485, 65535
    %v490 = vshrl.u32 %v485, 16
    %v491 = vmul.u32 %v487, %v489
    %v492 = vmul.u32 %v487, %v490
    %v493 = vmul.u32 %v488, %v489
    %v494 = vmul.u32 %v488, %v490
    %v495 = vshll.u32 %v492, 16
    %v496 = vshrl.u32 %v492, 16
    %v497 = vshll.u32 %v493, 16
    %v498 = vshrl.u32 %v493, 16
    %vm499 = vc.u32 %v491, %v495
    %v500 = vsel %vm499, 1, 0
    %v501 = vadd.s32 %v491, %v495
    %v502 = vadd.s32 %v494, %v500
    %vm503 = vc.u32 %v501, %v497
    %v504 = vsel %vm503, 1, 0
    %v505 = vadd.s32 %v501, %v497
    %v506 = vadd.s32 %v502, %v504
    %v507 = vadd.s32 %v506, %v496
    %v508 = vadd.s32 %v507, %v498
    %v509 = vand.u32 %v486, 65535
    %v510 = vshrl.u32 %v486, 16
    %v511 = vand.u32 %v481, 65535
    %v512 = vshrl.u32 %v481, 16
    %v513 = vmul.u32 %v509, %v511
    %v514 = vmul.u32 %v509, %v512
    %v515 = vmul.u32 %v510, %v511
    %v516 = vmul.u32 %v510, %v512
    %v517 = vshll.u32 %v514, 16
    %v518 = vshrl.u32 %v514, 16
    %v519 = vshll.u32 %v515, 16
    %v520 = vshrl.u32 %v515, 16
    %vm521 = vc.u32 %v513, %v517
    %v522 = vsel %vm521, 1, 0
    %v523 = vadd.s32 %v513, %v517
    %v524 = vadd.s32 %v516, %v522
    %vm525 = vc.u32 %v523, %v519
    %v526 = vsel %vm525, 1, 0
    %v527 = vadd.s32 %v523, %v519
    %v528 = vadd.s32 %v524, %v526
    %v529 = vadd.s32 %v528, %v518
    %v530 = vadd.s32 %v529, %v520
    %v531 = vmul.u32 %v486, %v477
    %v532 = vadd.s32 %v508, %v527
    %vm533 = vc.u32 %v508, %v527
    %v534 = vadd.s32 %v530, 1
    %v535 = vsel %vm533, %v534, %v530
    %v536 = vadd.s32 %v531, %v535
    %v537 = vadd.s32 %v536, 536870912
    %v538 = vshrl.u32 %v537, 30
    %v539 = vshll.u32 %v538, 30
    %v540 = vsub.s32 %v536, %v539
    %vm541 = vcmp.lt.s32.totalorder %v540, 0
    %v542 = vsub.s32 0, %v540
    %v543 = vsel %vm541, %v542, %v540
    %v544 = vclz %v543
    %v545 = vsub.s32 %v544, 2
    %vm546 = vcmp.gt.s32.totalorder 0, %v545
    %v547 = vsel %vm546, 0, %v545
    %v548 = vsub.s32 32, %v547
    %v549 = vshll.u32 %v540, %v547
    %v550 = vshrl.u32 %v532, %v548
    %v551 = vor.u32 %v549, %v550
    %v552 = vsub.s32 4294967266, %v547
    %v553 = vadd.s32 %v552, 127
    %v554 = vshll.u32 %v553, 23
    %v555 = vor.u32 4788187, %v554
    %v556 = vand.u32 2147483647, %v555
    %v558 = vcvt.s32.f32 %v551
    %v559 = vmul.f32 %v558, %v556
    %v560 = vxor.u32 %v559, 2147483648
    %v561 = vsel %vm440, %v560, %v559
    %v562 = vsub.s32 4, %v538
    %v563 = vsel %vm440, %v562, %v538
    %v564 = vsel %vm439, %v435, %v561
    %v565 = vsel %vm439, 0, %v563
    %v566 = vmul.f32 %v564, %v564
    %v567 = vmul.f32 %v566, -0.001358992
    %v568 = vadd.f32 %v567, 0.041655596
    %v569 = vmul.f32 %v566, %v568
    %v570 = vadd.f32 %v569, -0.4999988
    %v571 = vmul.f32 %v566, %v570
    %v572 = vadd.f32 1.0, %v571
    %v573 = vmul.f32 %v564, %v564
    %v574 = vmul.f32 %v573, -0.00019511016
    %v575 = vadd.f32 %v574, 0.008332121
    %v576 = vmul.f32 %v573, %v575
    %v577 = vadd.f32 %v576, -0.16666654
    %v578 = vmul.f32 %v573, %v577
    %v579 = vadd.f32 %v578, 1.0
    %v580 = vmul.f32 %v579, %v564
    %vm581 = vweird.f32 %v435
    %v582 = vand.u32 %v565, 3
    %vm583 = vcmp.lt.s32.totalorder %v582, 2
    %vm584 = vcmp.eq.s32.totalorder %v582, 0
    %v585 = vxor.u32 %v580, 2147483648
    %v586 = vsel %vm584, %v572, %v585
    %vm587 = vcmp.eq.s32.totalorder %v582, 2
    %v588 = vxor.u32 %v572, 2147483648
    %v589 = vsel %vm587, %v588, %v580
    %v590 = vsel %vm583, %v586, %v589
    %v591 = vsel %vm581, nan, %v590
    %v592 = vand.u32 2147483647, %v435
    %vm593 = vcmp.le.f32.partialorder %v592, 0.7853982
    %vm594 = vcmp.lt.s32.totalorder %v435, 0
    %v595 = vand.u32 %v435, 2139095040
    %v596 = vshrl.u32 %v595, 23
    %v597 = vsub.s32 %v596, 127
    %v598 = vand.u32 2147483647, %v435
    %v599 = vand.u32 %v598, 8388607
    %v600 = vor.u32 %v599, 8388608
    %v601 = vsub.s32 0, %v600
    %v602 = vadd.s32 %v597, 1
    %vm603 = vcmp.gt.s32.totalorder %v602, 0
    %v604 = vsel %vm603, %v602, 0
    %v605 = vshrl.u32 %v604, 5
    %v606 = vand.u32 %v604, 31
    %v607 = vsub.s32 32, %v606
    %v608 = vshrl.u32 683565275, %v607
    %v609 = vshll.u32 683565275, %v606
    %v610 = vshrl.u32 2475754826, %v607
    %v611 = vor.u32 %v609, %v610
    %v612 = vshll.u32 2475754826, %v606
    %v613 = vshrl.u32 2131351028, %v607
    %v614 = vor.u32 %v612, %v613
    %v615 = vshll.u32 2131351028, %v606
    %v616 = vshrl.u32 2102212464, %v607
    %v617 = vor.u32 %v615, %v616
    %v618 = vshll.u32 2102212464, %v606
    %v619 = vshrl.u32 920167782, %v607
    %v620 = vor.u32 %v618, %v619
    %v621 = vshll.u32 920167782, %v606
    %v622 = vshrl.u32 1326507024, %v607
    %v623 = vor.u32 %v621, %v622
    %vm624 = vcmp.lt.s32.totalorder %v605, 1
    %vm625 = vcmp.lt.s32.totalorder %v605, 2
    %vm626 = vcmp.lt.s32.totalorder %v605, 3
    %vm627 = vcmp.lt.s32.totalorder %v605, 4
    %v628 = vsel %vm624, %v608, %v611
    %v629 = vsel %vm627, %v617, 2102212464
    %v630 = vsel %vm626, %v614, %v629
    %v631 = vsel %vm625, %v628, %v630
    %v632 = vsel %vm624, %v611, %v614
    %v633 = vsel %vm627, %v620, 920167782
    %v634 = vsel %vm626, %v617, %v633
    %v635 = vsel %vm625, %v632, %v634
    %v636 = vsel %vm624, %v614, %v617
    %v637 = vsel %vm627, %v623, 1326507024
    %v638 = vsel %vm626, %v620, %v637
    %v639 = vsel %vm625, %v636, %v638
    %v640 = vshll.u32 %v600, 8
    %v641 = vand.u32 %v640, 65535
    %v642 = vshrl.u32 %v640, 16
    %v643 = vand.u32 %v639, 65535
    %v644 = vshrl.u32 %v639, 16
    %v645 = vmul.u32 %v641, %v643
    %v646 = vmul.u32 %v641, %v644
    %v647 = vmul.u32 %v642, %v643
    %v648 = vmul.u32 %v642, %v644
    %v649 = vshll.u32 %v646, 16
    %v650 = vshrl.u32 %v646, 16
    %v651 = vshll.u32 %v647, 16
    %v652 = vshrl.u32 %v647, 16
    %vm653 = vc.u32 %v645, %v649
    %v654 = vsel %vm653, 1, 0
    %v655 = vadd.s32 %v645, %v649
    %v656 = vadd.s32 %v648, %v654
    %vm657 = vc.u32 %v655, %v651
    %v658 = vsel %vm657, 1, 0
    %v659 = vadd.s32 %v655, %v651
    %v660 = vadd.s32 %v656, %v658
    %v661 = vadd.s32 %v660, %v650
    %v662 = vadd.s32 %v661, %v652
    %v663 = vand.u32 %v640, 65535
    %v664 = vshrl.u32 %v640, 16
    %v665 = vand.u32 %v635, 65535
    %v666 = vshrl.u32 %v635, 16
    %v667 = vmul.u32 %v663, %v665
    %v668 = vmul.u32 %v663, %v666
    %v669 = vmul.u32 %v664, %v665
    %v670 = vmul.u32 %v664, %v666
    %v671 = vshll.u32 %v668, 16
    %v672 = vshrl.u32 %v668, 16
    %v673 = vshll.u32 %v669, 16
    %v674 = vshrl.u32 %v669, 16
    %vm675 = vc.u32 %v667, %v671
    %v676 = vsel %vm675, 1, 0
    %v677 = vadd.s32 %v667, %v671
    %v678 = vadd.s32 %v670, %v676
    %vm679 = vc.u32 %v677, %v673
    %v680 = vsel %vm679, 1, 0
    %v681 = vadd.s32 %v677, %v673
    %v682 = vadd.s32 %v678, %v680
    %v683 = vadd.s32 %v682, %v672
    %v684 = vadd.s32 %v683, %v674
    %v685 = vmul.u32 %v640, %v631
    %v686 = vadd.s32 %v662, %v681
    %vm687 = vc.u32 %v662, %v681
    %v688 = vadd.s32 %v684, 1
    %v689 = vsel %vm687, %v688, %v684
    %v690 = vadd.s32 %v685, %v689
    %v691 = vadd.s32 %v690, 536870912
    %v692 = vshrl.u32 %v691, 30
    %v693 = vshll.u32 %v692, 30
    %v694 = vsub.s32 %v690, %v693
    %vm695 = vcmp.lt.s32.totalorder %v694, 0
    %v696 = vsub.s32 0, %v694
    %v697 = vsel %vm695, %v696, %v694
    %v698 = vclz %v697
    %v699 = vsub.s32 %v698, 2
    %vm700 = vcmp.gt.s32.totalorder 0, %v699
    %v701 = vsel %vm700, 0, %v699
    %v702 = vsub.s32 32, %v701
    %v703 = vshll.u32 %v694, %v701
    %v704 = vshrl.u32 %v686, %v702
    %v705 = vor.u32 %v703, %v704
    %v706 = vsub.s32 4294967266, %v701
    %v707 = vadd.s32 %v706, 127
    %v708 = vshll.u32 %v707, 23
    %v709 = vor.u32 4788187, %v708
    %v710 = vand.u32 2147483647, %v709
    %v712 = vcvt.s32.f32 %v705
    %v713 = vmul.f32 %v712, %v710
    %v714 = vxor.u32 %v713, 2147483648
    %v715 = vsel %vm594, %v714, %v713
    %v716 = vsub.s32 4, %v692
    %v717 = vsel %vm594, %v716, %v692
    %v718 = vsel %vm593, %v435, %v715
    %v719 = vsel %vm593, 0, %v717
    %v720 = vmul.f32 %v718, %v718
    %v721 = vmul.f32 %v720, -0.001358992
    %v722 = vadd.f32 %v721, 0.041655596
    %v723 = vmul.f32 %v720, %v722
    %v724 = vadd.f32 %v723, -0.4999988
    %v725 = vmul.f32 %v720, %v724
    %v726 = vadd.f32 1.0, %v725
    %v727 = vmul.f32 %v718, %v718
    %v728 = vmul.f32 %v727, -0.00019511016
    %v729 = vadd.f32 %v728, 0.008332121
    %v730 = vmul.f32 %v727, %v729
    %v731 = vadd.f32 %v730, -0.16666654
    %v732 = vmul.f32 %v727, %v731
    %v733 = vadd.f32 %v732, 1.0
    %v734 = vmul.f32 %v733, %v718
    %vm735 = vweird.f32 %v435
    %v736 = vadd.s32 %v719, 3
    %v737 = vand.u32 %v736, 3
    %vm738 = vcmp.lt.s32.totalorder %v737, 2
    %vm739 = vcmp.eq.s32.totalorder %v737, 0
    %v740 = vxor.u32 %v734, 2147483648
    %v741 = vsel %vm739, %v726, %v740
    %vm742 = vcmp.eq.s32.totalorder %v737, 2
    %v743 = vxor.u32 %v726, 2147483648
    %v744 = vsel %vm742, %v743, %v734
    %v745 = vsel %vm738, %v741, %v744
    %v746 = vsel %vm735, nan, %v745
    %v747 = vand.u32 2147483647, %v437
    %vm748 = vcmp.le.f32.partialorder %v747, 0.7853982
    %vm749 = vcmp.lt.s32.totalorder %v437, 0
    %v750 = vand.u32 %v437, 2139095040
    %v751 = vshrl.u32 %v750, 23
    %v752 = vsub.s32 %v751, 127
    %v753 = vand.u32 2147483647, %v437
    %v754 = vand.u32 %v753, 8388607
    %v755 = vor.u32 %v754, 8388608
    %v756 = vsub.s32 0, %v755
    %v757 = vadd.s32 %v752, 1
    %vm758 = vcmp.gt.s32.totalorder %v757, 0
    %v759 = vsel %vm758, %v757, 0
    %v760 = vshrl.u32 %v759, 5
    %v761 = vand.u32 %v759, 31
    %v762 = vsub.s32 32, %v761
    %v763 = vshrl.u32 683565275, %v762
    %v764 = vshll.u32 683565275, %v761
    %v765 = vshrl.u32 2475754826, %v762
    %v766 = vor.u32 %v764, %v765
    %v767 = vshll.u32 2475754826, %v761
    %v768 = vshrl.u32 2131351028, %v762
    %v769 = vor.u32 %v767, %v768
    %v770 = vshll.u32 2131351028, %v761
    %v771 = vshrl.u32 2102212464, %v762
    %v772 = vor.u32 %v770, %v771
    %v773 = vshll.u32 2102212464, %v761
    %v774 = vshrl.u32 920167782, %v762
    %v775 = vor.u32 %v773, %v774
    %v776 = vshll.u32 920167782, %v761
    %v777 = vshrl.u32 1326507024, %v762
    %v778 = vor.u32 %v776, %v777
    %vm779 = vcmp.lt.s32.totalorder %v760, 1
    %vm780 = vcmp.lt.s32.totalorder %v760, 2
    %vm781 = vcmp.lt.s32.totalorder %v760, 3
    %vm782 = vcmp.lt.s32.totalorder %v760, 4
    %v783 = vsel %vm779, %v763, %v766
    %v784 = vsel %vm782, %v772, 2102212464
    %v785 = vsel %vm781, %v769, %v784
    %v786 = vsel %vm780, %v783, %v785
    %v787 = vsel %vm779, %v766, %v769
    %v788 = vsel %vm782, %v775, 920167782
    %v789 = vsel %vm781, %v772, %v788
    %v790 = vsel %vm780, %v787, %v789
    %v791 = vsel %vm779, %v769, %v772
    %v792 = vsel %vm782, %v778, 1326507024
    %v793 = vsel %vm781, %v775, %v792
    %v794 = vsel %vm780, %v791, %v793
    %v795 = vshll.u32 %v755, 8
    %v796 = vand.u32 %v795, 65535
    %v797 = vshrl.u32 %v795, 16
    %v798 = vand.u32 %v794, 65535
    %v799 = vshrl.u32 %v794, 16
    %v800 = vmul.u32 %v796, %v798
    %v801 = vmul.u32 %v796, %v799
    %v802 = vmul.u32 %v797, %v798
    %v803 = vmul.u32 %v797, %v799
    %v804 = vshll.u32 %v801, 16
    %v805 = vshrl.u32 %v801, 16
    %v806 = vshll.u32 %v802, 16
    %v807 = vshrl.u32 %v802, 16
    %vm808 = vc.u32 %v800, %v804
    %v809 = vsel %vm808, 1, 0
    %v810 = vadd.s32 %v800, %v804
    %v811 = vadd.s32 %v803, %v809
    %vm812 = vc.u32 %v810, %v806
    %v813 = vsel %vm812, 1, 0
    %v814 = vadd.s32 %v810, %v806
    %v815 = vadd.s32 %v811, %v813
    %v816 = vadd.s32 %v815, %v805
    %v817 = vadd.s32 %v816, %v807
    %v818 = vand.u32 %v795, 65535
    %v819 = vshrl.u32 %v795, 16
    %v820 = vand.u32 %v790, 65535
    %v821 = vshrl.u32 %v790, 16
    %v822 = vmul.u32 %v818, %v820
    %v823 = vmul.u32 %v818, %v821
    %v824 = vmul.u32 %v819, %v820
    %v825 = vmul.u32 %v819, %v821
    %v826 = vshll.u32 %v823, 16
    %v827 = vshrl.u32 %v823, 16
    %v828 = vshll.u32 %v824, 16
    %v829 = vshrl.u32 %v824, 16
    %vm830 = vc.u32 %v822, %v826
    %v831 = vsel %vm830, 1, 0
    %v832 = vadd.s32 %v822, %v826
    %v833 = vadd.s32 %v825, %v831
    %vm834 = vc.u32 %v832, %v828
    %v835 = vsel %vm834, 1, 0
    %v836 = vadd.s32 %v832, %v828
    %v837 = vadd.s32 %v833, %v835
    %v838 = vadd.s32 %v837, %v827
    %v839 = vadd.s32 %v838, %v829
    %v840 = vmul.u32 %v795, %v786
    %v841 = vadd.s32 %v817, %v836
    %vm842 = vc.u32 %v817, %v836
    %v843 = vadd.s32 %v839, 1
    %v844 = vsel %vm842, %v843, %v839
    %v845 = vadd.s32 %v840, %v844
    %v846 = vadd.s32 %v845, 536870912
    %v847 = vshrl.u32 %v846, 30
    %v848 = vshll.u32 %v847, 30
    %v849 = vsub.s32 %v845, %v848
    %vm850 = vcmp.lt.s32.totalorder %v849, 0
    %v851 = vsub.s32 0, %v849
    %v852 = vsel %vm850, %v851, %v849
    %v853 = vclz %v852
    %v854 = vsub.s32 %v853, 2
    %vm855 = vcmp.gt.s32.totalorder 0, %v854
    %v856 = vsel %vm855, 0, %v854
    %v857 = vsub.s32 32, %v856
    %v858 = vshll.u32 %v849, %v856
    %v859 = vshrl.u32 %v841, %v857
    %v860 = vor.u32 %v858, %v859
    %v861 = vsub.s32 4294967266, %v856
    %v862 = vadd.s32 %v861, 127
    %v863 = vshll.u32 %v862, 23
    %v864 = vor.u32 4788187, %v863
    %v865 = vand.u32 2147483647, %v864
    %v867 = vcvt.s32.f32 %v860
    %v868 = vmul.f32 %v867, %v865
    %v869 = vxor.u32 %v868, 2147483648
    %v870 = vsel %vm749, %v869, %v868
    %v871 = vsub.s32 4, %v847
    %v872 = vsel %vm749, %v871, %v847
    %v873 = vsel %vm748, %v437, %v870
    %v874 = vsel %vm748, 0, %v872
    %v875 = vmul.f32 %v873, %v873
    %v876 = vmul.f32 %v875, -0.001358992
    %v877 = vadd.f32 %v876, 0.041655596
    %v878 = vmul.f32 %v875, %v877
    %v879 = vadd.f32 %v878, -0.4999988
    %v880 = vmul.f32 %v875, %v879
    %v881 = vadd.f32 1.0, %v880
    %v882 = vmul.f32 %v873, %v873
    %v883 = vmul.f32 %v882, -0.00019511016
    %v884 = vadd.f32 %v883, 0.008332121
    %v885 = vmul.f32 %v882, %v884
    %v886 = vadd.f32 %v885, -0.16666654
    %v887 = vmul.f32 %v882, %v886
    %v888 = vadd.f32 %v887, 1.0
    %v889 = vmul.f32 %v888, %v873
    %vm890 = vweird.f32 %v437
    %v891 = vand.u32 %v874, 3
    %vm892 = vcmp.lt.s32.totalorder %v891, 2
    %vm893 = vcmp.eq.s32.totalorder %v891, 0
    %v894 = vxor.u32 %v889, 2147483648
    %v895 = vsel %vm893, %v881, %v894
    %vm896 = vcmp.eq.s32.totalorder %v891, 2
    %v897 = vxor.u32 %v881, 2147483648
    %v898 = vsel %vm896, %v897, %v889
    %v899 = vsel %vm892, %v895, %v898
    %v900 = vsel %vm890, nan, %v899
    %v901 = vand.u32 2147483647, %v437
    %vm902 = vcmp.le.f32.partialorder %v901, 0.7853982
    %vm903 = vcmp.lt.s32.totalorder %v437, 0
    %v904 = vand.u32 %v437, 2139095040
    %v905 = vshrl.u32 %v904, 23
    %v906 = vsub.s32 %v905, 127
    %v907 = vand.u32 2147483647, %v437
    %v908 = vand.u32 %v907, 8388607
    %v909 = vor.u32 %v908, 8388608
    %v910 = vsub.s32 0, %v909
    %v911 = vadd.s32 %v906, 1
    %vm912 = vcmp.gt.s32.totalorder %v911, 0
    %v913 = vsel %vm912, %v911, 0
    %v914 = vshrl.u32 %v913, 5
    %v915 = vand.u32 %v913, 31
    %v916 = vsub.s32 32, %v915
    %v917 = vshrl.u32 683565275, %v916
    %v918 = vshll.u32 683565275, %v915
    %v919 = vshrl.u32 2475754826, %v916
    %v920 = vor.u32 %v918, %v919
    %v921 = vshll.u32 2475754826, %v915
    %v922 = vshrl.u32 2131351028, %v916
    %v923 = vor.u32 %v921, %v922
    %v924 = vshll.u32 2131351028, %v915
    %v925 = vshrl.u32 2102212464, %v916
    %v926 = vor.u32 %v924, %v925
    %v927 = vshll.u32 2102212464, %v915
    %v928 = vshrl.u32 920167782, %v916
    %v929 = vor.u32 %v927, %v928
    %v930 = vshll.u32 920167782, %v915
    %v931 = vshrl.u32 1326507024, %v916
    %v932 = vor.u32 %v930, %v931
    %vm933 = vcmp.lt.s32.totalorder %v914, 1
    %vm934 = vcmp.lt.s32.totalorder %v914, 2
    %vm935 = vcmp.lt.s32.totalorder %v914, 3
    %vm936 = vcmp.lt.s32.totalorder %v914, 4
    %v937 = vsel %vm933, %v917, %v920
    %v938 = vsel %vm936, %v926, 2102212464
    %v939 = vsel %vm935, %v923, %v938
    %v940 = vsel %vm934, %v937, %v939
    %v941 = vsel %vm933, %v920, %v923
    %v942 = vsel %vm936, %v929, 920167782
    %v943 = vsel %vm935, %v926, %v942
    %v944 = vsel %vm934, %v941, %v943
    %v945 = vsel %vm933, %v923, %v926
    %v946 = vsel %vm936, %v932, 1326507024
    %v947 = vsel %vm935, %v929, %v946
    %v948 = vsel %vm934, %v945, %v947
    %v949 = vshll.u32 %v909, 8
    %v950 = vand.u32 %v949, 65535
    %v951 = vshrl.u32 %v949, 16
    %v952 = vand.u32 %v948, 65535
    %v953 = vshrl.u32 %v948, 16
    %v954 = vmul.u32 %v950, %v952
    %v955 = vmul.u32 %v950, %v953
    %v956 = vmul.u32 %v951, %v952
    %v957 = vmul.u32 %v951, %v953
    %v958 = vshll.u32 %v955, 16
    %v959 = vshrl.u32 %v955, 16
    %v960 = vshll.u32 %v956, 16
    %v961 = vshrl.u32 %v956, 16
    %vm962 = vc.u32 %v954, %v958
    %v963 = vsel %vm962, 1, 0
    %v964 = vadd.s32 %v954, %v958
    %v965 = vadd.s32 %v957, %v963
    %vm966 = vc.u32 %v964, %v960
    %v967 = vsel %vm966, 1, 0
    %v968 = vadd.s32 %v964, %v960
    %v969 = vadd.s32 %v965, %v967
    %v970 = vadd.s32 %v969, %v959
    %v971 = vadd.s32 %v970, %v961
    %v972 = vand.u32 %v949, 65535
    %v973 = vshrl.u32 %v949, 16
    %v974 = vand.u32 %v944, 65535
    %v975 = vshrl.u32 %v944, 16
    %v976 = vmul.u32 %v972, %v974
    %v977 = vmul.u32 %v972, %v975
    %v978 = vmul.u32 %v973, %v974
    %v979 = vmul.u32 %v973, %v975
    %v980 = vshll.u32 %v977, 16
    %v981 = vshrl.u32 %v977, 16
    %v982 = vshll.u32 %v978, 16
    %v983 = vshrl.u32 %v978, 16
    %vm984 = vc.u32 %v976, %v980
    %v985 = vsel %vm984, 1, 0
    %v986 = vadd.s32 %v976, %v980
    %v987 = vadd.s32 %v979, %v985
    %vm988 = vc.u32 %v986, %v982
    %v989 = vsel %vm988, 1, 0
    %v990 = vadd.s32 %v986, %v982
    %v991 = vadd.s32 %v987, %v989
    %v992 = vadd.s32 %v991, %v981
    %v993 = vadd.s32 %v992, %v983
    %v994 = vmul.u32 %v949, %v940
    %v995 = vadd.s32 %v971, %v990
    %vm996 = vc.u32 %v971, %v990
    %v997 = vadd.s32 %v993, 1
    %v998 = vsel %vm996, %v997, %v993
    %v999 = vadd.s32 %v994, %v998
    %v1000 = vadd.s32 %v999, 536870912
    %v1001 = vshrl.u32 %v1000, 30
    %v1002 = vshll.u32 %v1001, 30
    %v1003 = vsub.s32 %v999, %v1002
    %vm1004 = vcmp.lt.s32.totalorder %v1003, 0
    %v1005 = vsub.s32 0, %v1003
    %v1006 = vsel %vm1004, %v1005, %v1003
    %v1007 = vclz %v1006
    %v1008 = vsub.s32 %v1007, 2
    %vm1009 = vcmp.gt.s32.totalorder 0, %v1008
    %v1010 = vsel %vm1009, 0, %v1008
    %v1011 = vsub.s32 32, %v1010
    %v1012 = vshll.u32 %v1003, %v1010
    %v1013 = vshrl.u32 %v995, %v1011
    %v1014 = vor.u32 %v1012, %v1013
    %v1015 = vsub.s32 4294967266, %v1010
    %v1016 = vadd.s32 %v1015, 127
    %v1017 = vshll.u32 %v1016, 23
    %v1018 = vor.u32 4788187, %v1017
    %v1019 = vand.u32 2147483647, %v1018
    %v1021 = vcvt.s32.f32 %v1014
    %v1022 = vmul.f32 %v1021, %v1019
    %v1023 = vxor.u32 %v1022, 2147483648
    %v1024 = vsel %vm903, %v1023, %v1022
    %v1025 = vsub.s32 4, %v1001
    %v1026 = vsel %vm903, %v1025, %v1001
    %v1027 = vsel %vm902, %v437, %v1024
    %v1028 = vsel %vm902, 0, %v1026
    %v1029 = vmul.f32 %v1027, %v1027
    %v1030 = vmul.f32 %v1029, -0.001358992
    %v1031 = vadd.f32 %v1030, 0.041655596
    %v1032 = vmul.f32 %v1029, %v1031
    %v1033 = vadd.f32 %v1032, -0.4999988
    %v1034 = vmul.f32 %v1029, %v1033
    %v1035 = vadd.f32 1.0, %v1034
    %v1036 = vmul.f32 %v1027, %v1027
    %v1037 = vmul.f32 %v1036, -0.00019511016
    %v1038 = vadd.f32 %v1037, 0.008332121
    %v1039 = vmul.f32 %v1036, %v1038
    %v1040 = vadd.f32 %v1039, -0.16666654
    %v1041 = vmul.f32 %v1036, %v1040
    %v1042 = vadd.f32 %v1041, 1.0
    %v1043 = vmul.f32 %v1042, %v1027
    %vm1044 = vweird.f32 %v437
    %v1045 = vadd.s32 %v1028, 3
    %v1046 = vand.u32 %v1045, 3
    %vm1047 = vcmp.lt.s32.totalorder %v1046, 2
    %vm1048 = vcmp.eq.s32.totalorder %v1046, 0
    %v1049 = vxor.u32 %v1043, 2147483648
    %v1050 = vsel %vm1048, %v1035, %v1049
    %vm1051 = vcmp.eq.s32.totalorder %v1046, 2
    %v1052 = vxor.u32 %v1035, 2147483648
    %v1053 = vsel %vm1051, %v1052, %v1043
    %v1054 = vsel %vm1047, %v1050, %v1053
    %v1055 = vsel %vm1044, nan, %v1054
    %v1056 = vmul.f32 %v278, %v591
    %v1057 = vmul.f32 %v278, %v746
    %v1058 = vsub.f32 0.0, %v433
    %v1059 = vmul.f32 %v1058, %v900
    %v1060 = vmul.f32 %v1058, %v1055
    %v1061 = vmul.f32 %v433, %v900
    %v1062 = vsub.f32 0.0, %v1057
    %v1063 = vld [vmem:[#allocation9] sm:$0xff]
    %s1064 = scalar_lea.vmem [#allocation9], %s76
    %v1065 = vld [vmem:[%s1064] sm:$0xff]
    %s1066 = scalar_lea.vmem [#allocation9], %s79
    %v1067 = vld [vmem:[%s1066] sm:$0xff]
    %s1068 = sadd.s32 0, 24
    %s1069 = scalar_lea.vmem [#allocation9], %s1068
    %v1070 = vld [vmem:[%s1069] sm:$0xff]
    %s1071 = sadd.s32 0, 32
    %s1072 = scalar_lea.vmem [#allocation9], %s1071
    %v1073 = vld [vmem:[%s1072] sm:$0xff]
    %s1074 = sadd.s32 0, 40
    %s1075 = scalar_lea.vmem [#allocation9], %s1074
    %v1076 = vld [vmem:[%s1075] sm:$0xff]
    %s1077 = sadd.s32 0, 48
    %s1078 = scalar_lea.vmem [#allocation9], %s1077
    %v1079 = vld [vmem:[%s1078] sm:$0xff]
    %s1080 = sadd.s32 0, 56
    %s1081 = scalar_lea.vmem [#allocation9], %s1080
    %v1082 = vld [vmem:[%s1081] sm:$0xff]
    %v1083 = vmul.f32 %v1056, %v1063
    %v1084 = vmul.f32 %v1057, %v1065
    %v1085 = vsub.f32 %v1083, %v1084
    %v1086 = vmul.f32 %v1056, %v1065
    %v1087 = vmul.f32 %v1057, %v1063
    %v1088 = vadd.f32 %v1086, %v1087
    %v1089 = vmul.f32 %v1059, %v1073
    %v1090 = vmul.f32 %v1060, %v1076
    %v1091 = vsub.f32 %v1089, %v1090
    %v1092 = vmul.f32 %v1059, %v1076
    %v1093 = vmul.f32 %v1060, %v1073
    %v1094 = vadd.f32 %v1092, %v1093
    %v1095 = vadd.f32 %v1085, %v1091
    %v1096 = vadd.f32 %v1088, %v1094
    %v1097 = vmul.f32 %v1056, %v1067
    %v1098 = vmul.f32 %v1057, %v1070
    %v1099 = vsub.f32 %v1097, %v1098
    %v1100 = vmul.f32 %v1056, %v1070
    %v1101 = vmul.f32 %v1057, %v1067
    %v1102 = vadd.f32 %v1100, %v1101
    %v1103 = vmul.f32 %v1059, %v1079
    %v1104 = vmul.f32 %v1060, %v1082
    %v1105 = vsub.f32 %v1103, %v1104
    %v1106 = vmul.f32 %v1059, %v1082
    %v1107 = vmul.f32 %v1060, %v1079
    %v1108 = vadd.f32 %v1106, %v1107
    %v1109 = vadd.f32 %v1099, %v1105
    %v1110 = vadd.f32 %v1102, %v1108
    %v1111 = vmul.f32 %v1061, %v1063
    %v1112 = vmul.f32 %v1060, %v1065
    %v1113 = vsub.f32 %v1111, %v1112
    %v1114 = vmul.f32 %v1061, %v1065
    %v1115 = vmul.f32 %v1060, %v1063
    %v1116 = vadd.f32 %v1114, %v1115
    %v1117 = vmul.f32 %v1056, %v1073
    %v1118 = vmul.f32 %v1062, %v1076
    %v1119 = vsub.f32 %v1117, %v1118
    %v1120 = vmul.f32 %v1056, %v1076
    %v1121 = vmul.f32 %v1062, %v1073
    %v1122 = vadd.f32 %v1120, %v1121
    %v1123 = vadd.f32 %v1113, %v1119
    %v1124 = vadd.f32 %v1116, %v1122
    %v1125 = vmul.f32 %v1061, %v1067
    %v1126 = vmul.f32 %v1060, %v1070
    %v1127 = vsub.f32 %v1125, %v1126
    %v1128 = vmul.f32 %v1061, %v1070
    %v1129 = vmul.f32 %v1060, %v1067
    %v1130 = vadd.f32 %v1128, %v1129
    %v1131 = vmul.f32 %v1056, %v1079
    %v1132 = vmul.f32 %v1062, %v1082
    %v1133 = vsub.f32 %v1131, %v1132
    %v1134 = vmul.f32 %v1056, %v1082
    %v1135 = vmul.f32 %v1062, %v1079
    %v1136 = vadd.f32 %v1134, %v1135
    %v1137 = vadd.f32 %v1127, %v1133
    %v1138 = vadd.f32 %v1130, %v1136
    %v1139 = vmul.f32 %v1095, %v1056
    %v1140 = vmul.f32 %v1096, %v1057
    %v1141 = vadd.f32 %v1139, %v1140
    %v1142 = vmul.f32 %v1096, %v1056
    %v1143 = vmul.f32 %v1095, %v1057
    %v1144 = vsub.f32 %v1142, %v1143
    %v1145 = vmul.f32 %v1109, %v1059
    %v1146 = vmul.f32 %v1110, %v1060
    %v1147 = vadd.f32 %v1145, %v1146
    %v1148 = vmul.f32 %v1110, %v1059
    %v1149 = vmul.f32 %v1109, %v1060
    %v1150 = vsub.f32 %v1148, %v1149
    %v1151 = vadd.f32 %v1141, %v1147
    %v1152 = vadd.f32 %v1144, %v1150
    %v1153 = vmul.f32 %v1095, %v1061
    %v1154 = vmul.f32 %v1096, %v1060
    %v1155 = vadd.f32 %v1153, %v1154
    %v1156 = vmul.f32 %v1096, %v1061
    %v1157 = vmul.f32 %v1095, %v1060
    %v1158 = vsub.f32 %v1156, %v1157
    %v1159 = vmul.f32 %v1109, %v1056
    %v1160 = vmul.f32 %v1110, %v1062
    %v1161 = vadd.f32 %v1159, %v1160
    %v1162 = vmul.f32 %v1110, %v1056
    %v1163 = vmul.f32 %v1109, %v1062
    %v1164 = vsub.f32 %v1162, %v1163
    %v1165 = vadd.f32 %v1155, %v1161
    %v1166 = vadd.f32 %v1158, %v1164
    %v1167 = vmul.f32 %v1123, %v1056
    %v1168 = vmul.f32 %v1124, %v1057
    %v1169 = vadd.f32 %v1167, %v1168
    %v1170 = vmul.f32 %v1124, %v1056
    %v1171 = vmul.f32 %v1123, %v1057
    %v1172 = vsub.f32 %v1170, %v1171
    %v1173 = vmul.f32 %v1137, %v1059
    %v1174 = vmul.f32 %v1138, %v1060
    %v1175 = vadd.f32 %v1173, %v1174
    %v1176 = vmul.f32 %v1138, %v1059
    %v1177 = vmul.f32 %v1137, %v1060
    %v1178 = vsub.f32 %v1176, %v1177
    %v1179 = vadd.f32 %v1169, %v1175
    %v1180 = vadd.f32 %v1172, %v1178
    %v1181 = vmul.f32 %v1123, %v1061
    %v1182 = vmul.f32 %v1124, %v1060
    %v1183 = vadd.f32 %v1181, %v1182
    %v1184 = vmul.f32 %v1124, %v1061
    %v1185 = vmul.f32 %v1123, %v1060
    %v1186 = vsub.f32 %v1184, %v1185
    %v1187 = vmul.f32 %v1137, %v1056
    %v1188 = vmul.f32 %v1138, %v1062
    %v1189 = vadd.f32 %v1187, %v1188
    %v1190 = vmul.f32 %v1138, %v1056
    %v1191 = vmul.f32 %v1137, %v1062
    %v1192 = vsub.f32 %v1190, %v1191
    %v1193 = vadd.f32 %v1183, %v1189
    %v1194 = vadd.f32 %v1186, %v1192
    %1195 = vst [vmem:[#allocation11] sm:$0xff] %v1151
    %s1196 = scalar_lea.vmem [#allocation11], %s76
    %1197 = vst [vmem:[%s1196] sm:$0xff] %v1152
    %s1198 = scalar_lea.vmem [#allocation11], %s79
    %1199 = vst [vmem:[%s1198] sm:$0xff] %v1165
    %s1200 = scalar_lea.vmem [#allocation11], %s1068
    %1201 = vst [vmem:[%s1200] sm:$0xff] %v1166
    %s1202 = scalar_lea.vmem [#allocation11], %s1071
    %1203 = vst [vmem:[%s1202] sm:$0xff] %v1179
    %s1204 = scalar_lea.vmem [#allocation11], %s1074
    %1205 = vst [vmem:[%s1204] sm:$0xff] %v1180
    %s1206 = scalar_lea.vmem [#allocation11], %s1077
    %1207 = vst [vmem:[%s1206] sm:$0xff] %v1193
    %s1208 = scalar_lea.vmem [#allocation11], %s1080
    %1209 = vst [vmem:[%s1208] sm:$0xff] %v1194
    // Predicated region
    $region34: #{tpu_custom_call.1} parent=1 // pred_check
      _
    $region35: #{tpu_custom_call.1} parent=1 // pred_check_branch
      %1211 = sbr.rel (0) target = $region37
    $region36: #{tpu_custom_call.1} parent=1 // pred_region
      %1213 = vsyncadd [#allocation4], 0
      %s1214 = sshll.u32 [#allocation11], 4
      %s1215 = int_to_ptr.vmem [resolvable:$true] %s1214
      %s1216 = sshll.u32 %s4, 4
      %s1217 = int_to_ptr.hbm [resolvable:$true] %s1216
      %1222 = dma.vmem_to_hbm [thread:$0]  %s1215, 1024, %s1217, [#allocation4], 128, 128, 8
    $region37: #{tpu_custom_call.1} parent=1 // pred_fallthru
      _
    // Predicated region
    $region38: #{tpu_custom_call.1} parent=1 // pred_check
      _
    $region39: #{tpu_custom_call.1} parent=1 // pred_check_branch
      %1224 = sbr.rel (0) target = $region41
    $region40: #{tpu_custom_call.1} parent=1 // pred_region
      %1226 = dma.done [#allocation4], 1024
    $region41: #{tpu_custom_call.1} parent=1 // pred_fallthru
      _
    %1227 = vsyncpa [#allocation3], 1
    %1228 = vsyncpa [#allocation10], 1
    %1229 = vsyncpa [#allocation4], 1
    %1230 = vsyncpa [#allocation5], 1
    %1231 = vsyncpa [#allocation7], 1

</llo_original>
